<compile_context>
chip_gen: v7x
topology: tpu7x:2x2x1
jax: 0.10.0
libtpu: 0.0.40
codegen_flags: <defaults>
</compile_context>

<pallas_src>
import functools

import jax
import jax.numpy as jnp
from jax import lax
from jax.experimental import pallas as pl
from jax.experimental.pallas import tpu as pltpu

NORM_EPS = 1e-12                 # F.normalize clamps the *norm* at eps
NORM_EPS_SQ = NORM_EPS * NORM_EPS


def _perm_kernel(fx_ref, fy_ref, mx_ref, my_ref, out_ref, *,
                 inv_tau, vy_true, use_max):
    # fx_ref: (TM, D)  fy_ref: (Vyp, D)  mx_ref: (TM, 1)  my_ref: (1, Vyp)
    # out_ref: (TM, Vyp)
    x = fx_ref[...].astype(jnp.float32)
    y = fy_ref[...].astype(jnp.float32)

    # L2 normalisation along D.  rsqrt(max(ss, eps^2)) == 1/max(||v||, eps),
    # matching F.normalize(p=2, eps=1e-12).  The 1/tau logit scale is folded
    # into the (TM,1) row scale so it never touches the (TM,Vy) logits.
    x_ss = jnp.sum(x * x, axis=-1, keepdims=True)                  # (TM, 1)
    y_ss = jnp.sum(y * y, axis=-1, keepdims=True)                  # (Vyp, 1)
    xn = x * (lax.rsqrt(jnp.maximum(x_ss, NORM_EPS_SQ)) * inv_tau)
    yn = y * lax.rsqrt(jnp.maximum(y_ss, NORM_EPS_SQ))

    # Cosine-similarity logits on the MXU, contracting over D directly
    # (no explicit transpose of yn).
    log_alpha = lax.dot_general(
        xn, yn,
        dimension_numbers=(((1,), (1,)), ((), ())),
        preferred_element_type=jnp.float32)                        # (TM, Vyp)

    vy_pad = log_alpha.shape[-1]
    n_pad = vy_pad - vy_true

    if use_max:
        # Numerically-safe path, only used when 1/tau is statically large.
        if n_pad:
            col_valid = lax.broadcasted_iota(jnp.int32, (1, vy_pad), 1) < vy_true
            log_alpha = jnp.where(col_valid, log_alpha, -jnp.inf)
        m = jnp.max(log_alpha, axis=-1, keepdims=True)             # (TM, 1)
        e = jnp.exp(log_alpha - m)                                 # (TM, Vyp)
        denom = jnp.sum(e, axis=-1, keepdims=True)                 # (TM, 1)
    else:
        # |log_alpha| <= 1/tau is small -> exp safe in f32.  Drops one (TM,Vy)
        # XLU max-reduce, one (TM,Vy) subtract and one live (TM,Vy) tile.
        e = jnp.exp(log_alpha)                                     # (TM, Vyp)
        denom = jnp.sum(e, axis=-1, keepdims=True)                 # (TM, 1)
        if n_pad:
            # Zero-padded feat_y rows give logit exactly 0.0 -> exp == 1.0,
            # so their denominator contribution is a static constant.
            denom = denom - jnp.float32(n_pad)

    # Fold the row mask into the (TM,1) softmax row scale -> the epilogue is
    # only two (TM,Vy) elementwise multiplies.
    mx_col = mx_ref[...].astype(jnp.float32)                       # (TM, 1)
    row_scale = pl.reciprocal(denom, approx=False) * mx_col        # (TM, 1)
    my_row = my_ref[...].astype(jnp.float32)                       # (1, Vyp)

    out_ref[...] = (e * row_scale * my_row).astype(out_ref.dtype)


def _vmem_sizes():
    """(tiling budget, requested scoped-VMEM limit), generation-aware."""
    try:
        phys = int(getattr(pltpu.get_tpu_info(), "vmem_capacity_bytes"))
        phys = max(phys, 16 << 20)
    except Exception:
        phys = 64 << 20            # conservative fallback: v7x physical VMEM
    budget = phys // 2             # tile-sizing budget (headroom for staging)
    limit = (phys * 3) // 4        # explicit limit we request from Mosaic
    return budget, limit


def _pick_row_tile(B, Vx, Vy_pad, D, budget_bytes):
    """Largest TM that divides Vx, is layout-legal (multiple of 8 or == Vx),
    fits the VMEM budget, and leaves >= 2 grid points when B == 1 so both
    v7x TensorCores get work."""
    # Approx. per-row f32 VMEM bytes at tile TM: double-buffered output tile
    # (2*Vy*4) + ~2 compiler-staged (TM,Vy) intermediates (2*Vy*4) +
    # double-buffered x tile (2*D*4).
    per_row = 16 * Vy_pad + 8 * D
    cap = max(8, budget_bytes // per_row)
    min_tiles = 2 if B == 1 else 1
    tm = min(Vx, cap)
    while tm >= 8:
        if Vx % tm == 0 and (tm % 8 == 0 or tm == Vx) and Vx // tm >= min_tiles:
            return tm
        tm -= 1
    return Vx   # tiny / awkward Vx: single full-extent tile (always legal)


def softmax_permutation_matrix(feat_x, feat_y, verts_mask_x, verts_mask_y,
                               tau=0.2, out_dtype=jnp.float32):
    """feat_x: [B, Vx, D], feat_y: [B, Vy, D],
    verts_mask_x: [B, Vx], verts_mask_y: [B, Vy] -> Pxy: [B, Vx, Vy].

    out_dtype=jnp.bfloat16 halves the dominant HBM writeback if downstream
    tolerates it; float32 (default) preserves the reference exactly."""
    B, Vx, D = feat_x.shape
    _, Vy, _ = feat_y.shape
    inv_tau = 1.0 / float(tau)
    use_max = inv_tau > 80.0     # exp overflows f32 only for extremely small tau

    # Pad Vy to a lane-dense multiple of 128 -> unmasked full-lane vst on the
    # (TM, Vy) output tile.  Padded columns are excluded from the softmax
    # denominator in-kernel and sliced off below.
    Vy_pad = max(128, ((Vy + 127) // 128) * 128)
    pad = Vy_pad - Vy
    feat_y_p = jnp.pad(feat_y, ((0, 0), (0, pad), (0, 0))) if pad else feat_y

    mask_x = verts_mask_x.astype(jnp.float32)[..., None]           # (B, Vx, 1)
    mask_y = verts_mask_y.astype(jnp.float32)[:, None, :]          # (B, 1, Vy)
    if pad:
        mask_y = jnp.pad(mask_y, ((0, 0), (0, 0), (0, pad)))       # (B, 1, Vyp)

    budget, vmem_limit = _vmem_sizes()
    TM = _pick_row_tile(B, Vx, Vy_pad, D, budget)
    grid = (B, Vx // TM)

    out_bytes = B * Vx * Vy_pad * jnp.dtype(out_dtype).itemsize
    in_bytes = ((feat_x.size + feat_y_p.size) * feat_x.dtype.itemsize
                + (mask_x.size + mask_y.size) * 4)
    cost = pl.CostEstimate(flops=2 * B * Vx * Vy_pad * D,
                           transcendentals=B * Vx * Vy_pad,
                           bytes_accessed=in_bytes + out_bytes)

    kernel = functools.partial(_perm_kernel, inv_tau=inv_tau,
                               vy_true=Vy, use_max=use_max)

    out = pl.pallas_call(
        kernel,
        out_shape=jax.ShapeDtypeStruct((B, Vx, Vy_pad), out_dtype),
        grid_spec=pltpu.PrefetchScalarGridSpec(
            num_scalar_prefetch=0,
            grid=grid,
            in_specs=[
                pl.BlockSpec((pl.Squeezed(), TM, D), lambda b, i: (b, i, 0)),
                pl.BlockSpec((pl.Squeezed(), Vy_pad, D), lambda b, i: (b, 0, 0)),
                pl.BlockSpec((pl.Squeezed(), TM, 1), lambda b, i: (b, i, 0)),
                pl.BlockSpec((pl.Squeezed(), 1, Vy_pad), lambda b, i: (b, 0, 0)),
            ],
            out_specs=pl.BlockSpec((pl.Squeezed(), TM, Vy_pad),
                                   lambda b, i: (b, i, 0)),
        ),
        compiler_params=pltpu.CompilerParams(
            dimension_semantics=("parallel", "parallel"),
            vmem_limit_bytes=int(vmem_limit)),
        cost_estimate=cost,
    )(feat_x, feat_y_p, mask_x, mask_y)

    return out[:, :, :Vy] if pad else out


def _reference(feat_x, feat_y, mask_x, mask_y, tau=0.2):
    def l2n(v):
        n = jnp.linalg.norm(v, axis=-1, keepdims=True)
        return v / jnp.maximum(n, NORM_EPS)
    la = jnp.einsum("bxd,byd->bxy", l2n(feat_x), l2n(feat_y),
                    precision="highest") / tau
    alpha = jax.nn.softmax(la, axis=-1)
    return alpha * mask_x[..., :, None] * mask_y[..., None, :]


if __name__ == "__main__":
    B, Vx, Vy, D = 2, 512, 128, 32   # Vy lane-dense; Vx covered by large row tiles
    key = jax.random.PRNGKey(0)
    k1, k2, k3, k4 = jax.random.split(key, 4)
    feat_x = jax.random.normal(k1, (B, Vx, D), dtype=jnp.float32)
    feat_y = jax.random.normal(k2, (B, Vy, D), dtype=jnp.float32)
    verts_mask_x = (jax.random.uniform(k3, (B, Vx)) > 0.2).astype(jnp.float32)
    verts_mask_y = (jax.random.uniform(k4, (B, Vy)) > 0.2).astype(jnp.float32)

    pxy = softmax_permutation_matrix(feat_x, feat_y, verts_mask_x, verts_mask_y)
    pxy = jax.block_until_ready(pxy)

    ref = _reference(feat_x, feat_y, verts_mask_x, verts_mask_y)
    assert pxy.shape == (B, Vx, Vy)
    assert jnp.allclose(pxy, ref, atol=1e-5, rtol=1e-4)
    # TODO(synk): hard=True straight-through path (scatter of row argmax) not
    # needed for the default config (hard=False); omitted.
    print("KERNEL_OK")
</pallas_src>

<mosaic_0001>
module attributes {stable_mosaic.version = 11 : i64} {
  func.func @_perm_kernel(%arg0: i32, %arg1: i32, %arg2: memref<1x512x32xf32, #tpu.memory_space<vmem>>, %arg3: memref<1x128x32xf32, #tpu.memory_space<vmem>>, %arg4: memref<1x512x1xf32, #tpu.memory_space<vmem>>, %arg5: memref<1x1x128xf32, #tpu.memory_space<vmem>>, %arg6: memref<1x512x128xf32, #tpu.memory_space<vmem>>) attributes {dimension_semantics = [#tpu.dimension_semantics<parallel>, #tpu.dimension_semantics<parallel>], iteration_bounds = array<i64: 2, 1>, scalar_prefetch = 0 : i64, scratch_operands = 0 : i64, tpu.core_type = #tpu.core_type<tc>, window_params = [{transform_indices = @transform_0, window_bounds = array<i64: 1, 512, 32>}, {transform_indices = @transform_1, window_bounds = array<i64: 1, 128, 32>}, {transform_indices = @transform_2, window_bounds = array<i64: 1, 512, 1>}, {transform_indices = @transform_3, window_bounds = array<i64: 1, 1, 128>}, {transform_indices = @transform_4, window_bounds = array<i64: 1, 512, 128>}]} {
    %c0 = arith.constant 0 : index
    %c0_0 = arith.constant 0 : index
    %c0_1 = arith.constant 0 : index
    %0 = vector.load %arg2[%c0, %c0_0, %c0_1] : memref<1x512x32xf32, #tpu.memory_space<vmem>>, vector<1x512x32xf32>
    %1 = vector.shape_cast %0 : vector<1x512x32xf32> to vector<512x32xf32>
    %c0_2 = arith.constant 0 : index
    %c0_3 = arith.constant 0 : index
    %c0_4 = arith.constant 0 : index
    %2 = vector.load %arg3[%c0_2, %c0_3, %c0_4] : memref<1x128x32xf32, #tpu.memory_space<vmem>>, vector<1x128x32xf32>
    %3 = vector.shape_cast %2 : vector<1x128x32xf32> to vector<128x32xf32>
    %4 = arith.mulf %1, %1 : vector<512x32xf32>
    %cst = arith.constant dense<0.000000e+00> : vector<512xf32>
    %5 = vector.multi_reduction <add>, %4, %cst [1] : vector<512x32xf32> to vector<512xf32>
    %6 = vector.shape_cast %5 : vector<512xf32> to vector<512x1xf32>
    %7 = arith.mulf %3, %3 : vector<128x32xf32>
    %cst_5 = arith.constant dense<0.000000e+00> : vector<128xf32>
    %8 = vector.multi_reduction <add>, %7, %cst_5 [1] : vector<128x32xf32> to vector<128xf32>
    %9 = vector.shape_cast %8 : vector<128xf32> to vector<128x1xf32>
    %cst_6 = arith.constant 1.000000e-24 : f32
    %10 = vector.broadcast %cst_6 : f32 to vector<512x1xf32>
    %11 = arith.maximumf %6, %10 : vector<512x1xf32>
    %12 = math.rsqrt %11 : vector<512x1xf32>
    %cst_7 = arith.constant 5.000000e+00 : f32
    %13 = vector.broadcast %cst_7 : f32 to vector<512x1xf32>
    %14 = arith.mulf %12, %13 : vector<512x1xf32>
    %15 = vector.broadcast %14 : vector<512x1xf32> to vector<512x32xf32>
    %16 = arith.mulf %1, %15 : vector<512x32xf32>
    %cst_8 = arith.constant 1.000000e-24 : f32
    %17 = vector.broadcast %cst_8 : f32 to vector<128x1xf32>
    %18 = arith.maximumf %9, %17 : vector<128x1xf32>
    %19 = math.rsqrt %18 : vector<128x1xf32>
    %20 = vector.broadcast %19 : vector<128x1xf32> to vector<128x32xf32>
    %21 = arith.mulf %3, %20 : vector<128x32xf32>
    %cst_9 = arith.constant dense<0.000000e+00> : vector<512x128xf32>
    %22 = tpu.matmul %16, %21, %cst_9 {dimension_numbers = #tpu.dot_dimension_numbers<[1], [1], [0], [0], [0, 0, 1, 0], [], []>} : vector<512x32xf32>, vector<128x32xf32>, vector<512x128xf32> -> vector<512x128xf32>
    %23 = math.exp %22 : vector<512x128xf32>
    %cst_10 = arith.constant dense<0.000000e+00> : vector<512xf32>
    %24 = vector.multi_reduction <add>, %23, %cst_10 [1] : vector<512x128xf32> to vector<512xf32>
    %25 = vector.shape_cast %24 : vector<512xf32> to vector<512x1xf32>
    %c0_11 = arith.constant 0 : index
    %c0_12 = arith.constant 0 : index
    %c0_13 = arith.constant 0 : index
    %26 = vector.load %arg4[%c0_11, %c0_12, %c0_13] : memref<1x512x1xf32, #tpu.memory_space<vmem>>, vector<1x512x1xf32>
    %27 = vector.shape_cast %26 : vector<1x512x1xf32> to vector<512x1xf32>
    %28 = tpu.reciprocal %25 : vector<512x1xf32> -> vector<512x1xf32>
    %29 = arith.mulf %28, %27 : vector<512x1xf32>
    %c0_14 = arith.constant 0 : index
    %c0_15 = arith.constant 0 : index
    %c0_16 = arith.constant 0 : index
    %30 = vector.load %arg5[%c0_14, %c0_15, %c0_16] : memref<1x1x128xf32, #tpu.memory_space<vmem>>, vector<1x1x128xf32>
    %31 = vector.shape_cast %30 : vector<1x1x128xf32> to vector<1x128xf32>
    %32 = vector.broadcast %29 : vector<512x1xf32> to vector<512x128xf32>
    %33 = arith.mulf %23, %32 : vector<512x128xf32>
    %34 = vector.broadcast %31 : vector<1x128xf32> to vector<512x128xf32>
    %35 = arith.mulf %33, %34 : vector<512x128xf32>
    %c0_17 = arith.constant 0 : index
    %c0_18 = arith.constant 0 : index
    %c0_19 = arith.constant 0 : index
    %36 = vector.load %arg6[%c0_17, %c0_18, %c0_19] : memref<1x512x128xf32, #tpu.memory_space<vmem>>, vector<1x512x128xf32>
    %37 = vector.shape_cast %36 : vector<1x512x128xf32> to vector<512x128xf32>
    %38 = vector.shape_cast %35 : vector<512x128xf32> to vector<1x512x128xf32>
    tpu.vector_store %arg6[%c0_17, %c0_18, %c0_19], %38 {strides = array<i32>} : memref<1x512x128xf32, #tpu.memory_space<vmem>>, vector<1x512x128xf32>,
    return
  }
  func.func @transform_0(%arg0: i32, %arg1: i32) -> (i32, i32, i32) {
    %c0_i32 = arith.constant 0 : i32
    %c0_i32_0 = arith.constant 0 : i32
    return %arg0, %arg1, %c0_i32 : i32, i32, i32
  }
  func.func @transform_1(%arg0: i32, %arg1: i32) -> (i32, i32, i32) {
    %c0_i32 = arith.constant 0 : i32
    %c0_i32_0 = arith.constant 0 : i32
    %c0_i32_1 = arith.constant 0 : i32
    return %arg0, %c0_i32, %c0_i32_0 : i32, i32, i32
  }
  func.func @transform_2(%arg0: i32, %arg1: i32) -> (i32, i32, i32) {
    %c0_i32 = arith.constant 0 : i32
    %c0_i32_0 = arith.constant 0 : i32
    return %arg0, %arg1, %c0_i32 : i32, i32, i32
  }
  func.func @transform_3(%arg0: i32, %arg1: i32) -> (i32, i32, i32) {
    %c0_i32 = arith.constant 0 : i32
    %c0_i32_0 = arith.constant 0 : i32
    %c0_i32_1 = arith.constant 0 : i32
    return %arg0, %c0_i32, %c0_i32_0 : i32, i32, i32
  }
  func.func @transform_4(%arg0: i32, %arg1: i32) -> (i32, i32, i32) {
    %c0_i32 = arith.constant 0 : i32
    %c0_i32_0 = arith.constant 0 : i32
    return %arg0, %arg1, %c0_i32 : i32, i32, i32
  }
}

</mosaic_0001>

<llo_original>
// kernel: tpu_custom_call.1
$region0: #{tpu_custom_call.1}
  #allocation0 [shape = 'u32[]', space=smem, size = 0x4, offset = 0x4, fixed_abs, tag = 'smem constant byte address 0x4 - core index']
  #allocation1 [shape = 'u32[144,128]{1,0:T(1,128)}', space=vmem, size = 0x12000, scoped, tag = 'internal scratch']
  %s0 = inlined_call_operand.vmem [shape: f32[2,512,32], index: 0, kind: input, shape index: {}]
  %s1 = inlined_call_operand.vmem [shape: f32[2,128,32], index: 1, kind: input, shape index: {}]
  %s2 = inlined_call_operand.vmem [shape: f32[2,512,1], index: 2, kind: input, shape index: {}]
  %s3 = inlined_call_operand.vmem [shape: f32[2,1,128], index: 3, kind: input, shape index: {}]
  %s4 = inlined_call_operand.hbm [shape: f32[2,512,128], index: 4, kind: output, shape index: {}]
  %s5 = sld [smem:[#allocation0]]
  $region49: #{tpu_custom_call.1} parent=0
    _
  %s7 = ssub.s32 1, %s5
  %s8 = scalar_select 0, %s7, %s5
  $region1: #{tpu_custom_call.1} parent=0
    #allocation2 [shape = 'u8[524288]{0}', space=vmem, size = 0x80000, scoped, tag = 'output window, operand 0']
    #allocation3 [shape = 's32[2]{0}', space=sflag, size = 0x8, scoped, tag = 'scoped memory for tpu_custom_call.1']
    %9 = vsyncpa [#allocation3], 0
    %s10 = scalar_lea.sflag [#allocation3], 1
    %11 = vsyncpa %s10, 0
    loop: start=0, step=1, limit=4
    $region2: #{tpu_custom_call.1} parent=1 // loop_pre_header
      _
    $region3: #{tpu_custom_call.1} parent=1 // loop_header
      %s13 = sphi 0, %s17
      %p14 = scmp.ge.s32.totalorder %s13, 4
      %s20 = sphi 0, %s32
      %s21 = sphi 0, %s28
      %s22 = sphi 0, %s20
      %s23 = sphi 0, %s21
      %s24 = sphi 0, %s22
      %s25 = sphi 0, %s23
      %s37 = sphi 0, %s39
      %s40 = sphi 0, %s37
      %s41 = sphi 0, %s40
      %s57 = sphi 0, %s41
      %s63 = sphi 0, %s65
      %s66 = sphi 0, %s63
      %s67 = sphi 0, %s66
      %s83 = sphi 0, %s67
      %s91 = sphi 0, %s93
      %s94 = sphi 0, %s91
      %s95 = sphi 0, %s94
      %s111 = sphi 0, %s95
      %s117 = sphi 0, %s119
      %s120 = sphi 0, %s117
      %s121 = sphi 0, %s120
      %s137 = sphi 0, %s121
      %s145 = sphi 0, %s147
      %s148 = sphi 0, %s145
      %s149 = sphi 0, %s148
      %s165 = sphi 0, %s149
    $region4: #{tpu_custom_call.1} parent=1 // loop_header_branch
      %16 = sbr.rel (%p14) target = $region8
    $region5: #{tpu_custom_call.1} parent=1 // loop_body
      %s18 = ssub.s32 %s13, 1
      %s19 = ssub.s32 %s13, 2
      %s26 = sadd.s32 1, %s21
      %p27 = scmp.ge.s32.totalorder %s26, 1
      %s28 = scalar_select %p27, 0, %s26
      %s29 = sadd.s32 1, %s20
      %s30 = scalar_select %p27, %s29, %s20
      %p31 = scmp.ge.s32.totalorder %s30, 2
      %s32 = scalar_select %p31, 0, %s30
      %s33 = ssub.s32 %s20, %s32
      %s34 = ssub.s32 %s21, %s28
      %s35 = sor.u32 %s33, %s34
      %p36 = scmp.eq.s32.totalorder %s35, 0
      %s38 = sadd.s32 %s37, 1
      %s39 = scalar_select %p36, %s37, %s38
      %p42 = pneg %p36
      %p43 = scmp.eq.s32.totalorder %s13, 1
      %p44 = por %p42, %p43
      %p45 = scmp.ne.s32.totalorder %s37, %s40
      %p46 = scmp.eq.s32.totalorder %s13, 0
      %p47 = por %p45, %p46
      %p48 = scmp.ne.s32.totalorder %s37, %s40
      %p49 = scmp.eq.s32.totalorder %s18, 1
      %p50 = por %p48, %p49
      %p51 = scmp.ne.s32.totalorder %s40, %s41
      %p52 = scmp.eq.s32.totalorder %s18, 0
      %p53 = por %p51, %p52
      %p54 = scmp.ne.s32.totalorder %s40, %s41
      %p55 = scmp.eq.s32.totalorder %s19, 1
      %p56 = por %p54, %p55
      %p58 = scmp.ne.s32.totalorder %s41, %s57
      %p59 = scmp.eq.s32.totalorder %s19, 0
      %p60 = por %p58, %p59
      %s61 = ssub.s32 %s20, %s32
      %p62 = scmp.eq.s32.totalorder %s61, 0
      %s64 = sadd.s32 %s63, 1
      %s65 = scalar_select %p62, %s63, %s64
      %p68 = pneg %p62
      %p69 = scmp.eq.s32.totalorder %s13, 1
      %p70 = por %p68, %p69
      %p71 = scmp.ne.s32.totalorder %s63, %s66
      %p72 = scmp.eq.s32.totalorder %s13, 0
      %p73 = por %p71, %p72
      %p74 = scmp.ne.s32.totalorder %s63, %s66
      %p75 = scmp.eq.s32.totalorder %s18, 1
      %p76 = por %p74, %p75
      %p77 = scmp.ne.s32.totalorder %s66, %s67
      %p78 = scmp.eq.s32.totalorder %s18, 0
      %p79 = por %p77, %p78
      %p80 = scmp.ne.s32.totalorder %s66, %s67
      %p81 = scmp.eq.s32.totalorder %s19, 1
      %p82 = por %p80, %p81
      %p84 = scmp.ne.s32.totalorder %s67, %s83
      %p85 = scmp.eq.s32.totalorder %s19, 0
      %p86 = por %p84, %p85
      %s87 = ssub.s32 %s20, %s32
      %s88 = ssub.s32 %s21, %s28
      %s89 = sor.u32 %s87, %s88
      %p90 = scmp.eq.s32.totalorder %s89, 0
      %s92 = sadd.s32 %s91, 1
      %s93 = scalar_select %p90, %s91, %s92
      %p96 = pneg %p90
      %p97 = scmp.eq.s32.totalorder %s13, 1
      %p98 = por %p96, %p97
      %p99 = scmp.ne.s32.totalorder %s91, %s94
      %p100 = scmp.eq.s32.totalorder %s13, 0
      %p101 = por %p99, %p100
      %p102 = scmp.ne.s32.totalorder %s91, %s94
      %p103 = scmp.eq.s32.totalorder %s18, 1
      %p104 = por %p102, %p103
      %p105 = scmp.ne.s32.totalorder %s94, %s95
      %p106 = scmp.eq.s32.totalorder %s18, 0
      %p107 = por %p105, %p106
      %p108 = scmp.ne.s32.totalorder %s94, %s95
      %p109 = scmp.eq.s32.totalorder %s19, 1
      %p110 = por %p108, %p109
      %p112 = scmp.ne.s32.totalorder %s95, %s111
      %p113 = scmp.eq.s32.totalorder %s19, 0
      %p114 = por %p112, %p113
      %s115 = ssub.s32 %s20, %s32
      %p116 = scmp.eq.s32.totalorder %s115, 0
      %s118 = sadd.s32 %s117, 1
      %s119 = scalar_select %p116, %s117, %s118
      %p122 = pneg %p116
      %p123 = scmp.eq.s32.totalorder %s13, 1
      %p124 = por %p122, %p123
      %p125 = scmp.ne.s32.totalorder %s117, %s120
      %p126 = scmp.eq.s32.totalorder %s13, 0
      %p127 = por %p125, %p126
      %p128 = scmp.ne.s32.totalorder %s117, %s120
      %p129 = scmp.eq.s32.totalorder %s18, 1
      %p130 = por %p128, %p129
      %p131 = scmp.ne.s32.totalorder %s120, %s121
      %p132 = scmp.eq.s32.totalorder %s18, 0
      %p133 = por %p131, %p132
      %p134 = scmp.ne.s32.totalorder %s120, %s121
      %p135 = scmp.eq.s32.totalorder %s19, 1
      %p136 = por %p134, %p135
      %p138 = scmp.ne.s32.totalorder %s121, %s137
      %p139 = scmp.eq.s32.totalorder %s19, 0
      %p140 = por %p138, %p139
      %s141 = ssub.s32 %s20, %s32
      %s142 = ssub.s32 %s21, %s28
      %s143 = sor.u32 %s141, %s142
      %p144 = scmp.eq.s32.totalorder %s143, 0
      %s146 = sadd.s32 %s145, 1
      %s147 = scalar_select %p144, %s145, %s146
      %p150 = pneg %p144
      %p151 = scmp.eq.s32.totalorder %s13, 1
      %p152 = por %p150, %p151
      %p153 = scmp.ne.s32.totalorder %s145, %s148
      %p154 = scmp.eq.s32.totalorder %s13, 0
      %p155 = por %p153, %p154
      %p156 = scmp.ne.s32.totalorder %s145, %s148
      %p157 = scmp.eq.s32.totalorder %s18, 1
      %p158 = por %p156, %p157
      %p159 = scmp.ne.s32.totalorder %s148, %s149
      %p160 = scmp.eq.s32.totalorder %s18, 0
      %p161 = por %p159, %p160
      %p162 = scmp.ne.s32.totalorder %s148, %s149
      %p163 = scmp.eq.s32.totalorder %s19, 1
      %p164 = por %p162, %p163
      %p166 = scmp.ne.s32.totalorder %s149, %s165
      %p167 = scmp.eq.s32.totalorder %s19, 0
      %p168 = por %p166, %p167
      %p169 = scmp.le.s32.totalorder 1, %s13
      %p170 = scmp.lt.s32.totalorder %s13, 3
      %p171 = pnand %p169, %p170
      %p172 = pneg %p171
      // Predicated region
      $region9: #{tpu_custom_call.1} parent=5 // pred_check
        _
      $region10: #{tpu_custom_call.1} parent=5 // pred_check_branch
        %174 = sbr.rel (%p171) target = $region12
      $region11: #{tpu_custom_call.1} parent=5 // pred_region
        %s175 = ssub.s32 %s13, 1
      $region12: #{tpu_custom_call.1} parent=5 // pred_fallthru
        _
      %p176 = scmp.lt.s32.totalorder %s13, 2
      // Predicated region
      $region13: #{tpu_custom_call.1} parent=5 // pred_check
        %p177 = pneg %p176
      $region14: #{tpu_custom_call.1} parent=5 // pred_check_branch
        %179 = sbr.rel (%p177) target = $region16
      $region15: #{tpu_custom_call.1} parent=5 // pred_region
        // Predicated region
        $region17: #{tpu_custom_call.1} parent=15 // pred_check
          %p180 = pneg %p47
        $region18: #{tpu_custom_call.1} parent=15 // pred_check_branch
          %182 = sbr.rel (%p180) target = $region20
        $region19: #{tpu_custom_call.1} parent=15 // pred_region
          %s183 = smul.u32 64, %s21
          %p184 = scmp.lt.s32.totalorder %s20, 1
          %s185 = scalar_select %p184, %s20, 1
          %p186 = scmp.lt.s32.totalorder %s183, 63
          %s187 = scalar_select %p186, %s183, 63
          %s188 = smul.addr %s185, 64
          %s189 = sadd.s32 %s187, %s188
          %s190 = smul.addr %s189, 8
          %s191 = scalar_lea.vmem %s0, %s190
          %s192 = smul.u32 64, %s21
        $region20: #{tpu_custom_call.1} parent=15 // pred_fallthru
          _
        // Predicated region
        $region21: #{tpu_custom_call.1} parent=15 // pred_check
          %p193 = pneg %p73
        $region22: #{tpu_custom_call.1} parent=15 // pred_check_branch
          %195 = sbr.rel (%p193) target = $region24
        $region23: #{tpu_custom_call.1} parent=15 // pred_region
          %p196 = scmp.lt.s32.totalorder %s20, 1
          %s197 = scalar_select %p196, %s20, 1
          %s198 = smul.addr %s197, 16
          %s199 = smul.addr %s198, 8
          %s200 = scalar_lea.vmem %s1, %s199
        $region24: #{tpu_custom_call.1} parent=15 // pred_fallthru
          _
        // Predicated region
        $region25: #{tpu_custom_call.1} parent=15 // pred_check
          %p201 = pneg %p101
        $region26: #{tpu_custom_call.1} parent=15 // pred_check_branch
          %203 = sbr.rel (%p201) target = $region28
        $region27: #{tpu_custom_call.1} parent=15 // pred_region
          %s204 = smul.u32 64, %s21
          %p205 = scmp.lt.s32.totalorder %s20, 1
          %s206 = scalar_select %p205, %s20, 1
          %p207 = scmp.lt.s32.totalorder %s204, 63
          %s208 = scalar_select %p207, %s204, 63
          %s209 = smul.addr %s206, 64
          %s210 = sadd.s32 %s208, %s209
          %s211 = smul.addr %s210, 8
          %s212 = scalar_lea.vmem %s2, %s211
          %s213 = smul.u32 64, %s21
        $region28: #{tpu_custom_call.1} parent=15 // pred_fallthru
          _
        // Predicated region
        $region29: #{tpu_custom_call.1} parent=15 // pred_check
          %p214 = pneg %p127
        $region30: #{tpu_custom_call.1} parent=15 // pred_check_branch
          %216 = sbr.rel (%p214) target = $region32
        $region31: #{tpu_custom_call.1} parent=15 // pred_region
          %p217 = scmp.lt.s32.totalorder %s20, 1
          %s218 = scalar_select %p217, %s20, 1
          %s219 = scalar_lea.vmem %s3, %s218
        $region32: #{tpu_custom_call.1} parent=15 // pred_fallthru
          _
      $region16: #{tpu_custom_call.1} parent=5 // pred_fallthru
        _
      %p220 = scmp.le.s32.totalorder 1, %s13
      %p221 = scmp.lt.s32.totalorder %s13, 3
      %p222 = pnand %p220, %p221
      %p223 = pneg %p222
      // Predicated region
      $region33: #{tpu_custom_call.1} parent=5 // pred_check
        _
      $region34: #{tpu_custom_call.1} parent=5 // pred_check_branch
        %225 = sbr.rel (%p222) target = $region36
      $region35: #{tpu_custom_call.1} parent=5 // pred_region
        %s226 = ssub.s32 %s13, 1
        %s227 = smul.u32 64, %s23
        %p228 = scmp.lt.s32.totalorder %s22, 1
        %s229 = scalar_select %p228, %s22, 1
        %p230 = scmp.lt.s32.totalorder %s227, 63
        %s231 = scalar_select %p230, %s227, 63
        %s232 = smul.addr %s229, 64
        %s233 = sadd.s32 %s231, %s232
        %s234 = smul.addr %s233, 8
        %s235 = scalar_lea.vmem %s0, %s234
        %p236 = pneg %p53
        %p237 = pneg %p50
        %p238 = scmp.lt.s32.totalorder %s22, 1
        %s239 = scalar_select %p238, %s22, 1
        %s240 = smul.addr %s239, 16
        %s241 = smul.addr %s240, 8
        %s242 = scalar_lea.vmem %s1, %s241
        %p243 = pneg %p79
        %p244 = pneg %p76
        %s245 = smul.u32 64, %s23
        %p246 = scmp.lt.s32.totalorder %s22, 1
        %s247 = scalar_select %p246, %s22, 1
        %p248 = scmp.lt.s32.totalorder %s245, 63
        %s249 = scalar_select %p248, %s245, 63
        %s250 = smul.addr %s247, 64
        %s251 = sadd.s32 %s249, %s250
        %s252 = smul.addr %s251, 8
        %s253 = scalar_lea.vmem %s2, %s252
        %p254 = pneg %p107
        %p255 = pneg %p104
        %p256 = scmp.lt.s32.totalorder %s22, 1
        %s257 = scalar_select %p256, %s22, 1
        %s258 = scalar_lea.vmem %s3, %s257
        %p259 = pneg %p133
        %p260 = pneg %p130
        %p261 = pneg %p161
        %p262 = pneg %p158
        %s263 = sand.u32 %s148, 1
        %s264 = scalar_lea.sflag [#allocation3], %s263
        %s265 = sand.u32 %s148, 1
        %s266 = smul.addr %s265, 512
        %s267 = scalar_lea.vmem [#allocation2], %s266
        %s268 = smul.u32 64, %s23
        %p269 = scmp.lt.s32.totalorder %s22, 1
        %s270 = scalar_select %p269, %s22, 1
        %p271 = scmp.lt.s32.totalorder %s268, 63
        %s272 = scalar_select %p271, %s268, 63
        %s273 = smul.addr %s270, 64
        %s274 = sadd.s32 %s272, %s273
        %s275 = smul.addr %s274, 8
        %s276 = scalar_lea.vmem %s0, %s275
        %s277 = smul.u32 64, %s23
        %p278 = scmp.lt.s32.totalorder %s22, 1
        %s279 = scalar_select %p278, %s22, 1
        %s280 = smul.addr %s279, 16
        %s281 = smul.addr %s280, 8
        %s282 = scalar_lea.vmem %s1, %s281
        %s283 = smul.u32 64, %s23
        %p284 = scmp.lt.s32.totalorder %s22, 1
        %s285 = scalar_select %p284, %s22, 1
        %p286 = scmp.lt.s32.totalorder %s283, 63
        %s287 = scalar_select %p286, %s283, 63
        %s288 = smul.addr %s285, 64
        %s289 = sadd.s32 %s287, %s288
        %s290 = smul.addr %s289, 8
        %s291 = scalar_lea.vmem %s2, %s290
        %s292 = smul.u32 64, %s23
        %p293 = scmp.lt.s32.totalorder %s22, 1
        %s294 = scalar_select %p293, %s22, 1
        %s295 = scalar_lea.vmem %s3, %s294
        %s296 = smul.u32 64, %s23
        %v297 = vld [vmem:[%s276] sm:$0xff]
        %v298 = vld [vmem:[%s276 + $0x8] sm:$0xff]
        %v299 = vld [vmem:[%s276 + $0x10] sm:$0xff]
        %v300 = vld [vmem:[%s276 + $0x18] sm:$0xff]
        %v301 = vld [vmem:[%s276 + $0x20] sm:$0xff]
        %v302 = vld [vmem:[%s276 + $0x28] sm:$0xff]
        %v303 = vld [vmem:[%s276 + $0x30] sm:$0xff]
        %v304 = vld [vmem:[%s276 + $0x38] sm:$0xff]
        %v305 = vld [vmem:[%s276 + $0x40] sm:$0xff]
        %v306 = vld [vmem:[%s276 + $0x48] sm:$0xff]
        %v307 = vld [vmem:[%s276 + $0x50] sm:$0xff]
        %v308 = vld [vmem:[%s276 + $0x58] sm:$0xff]
        %v309 = vld [vmem:[%s276 + $0x60] sm:$0xff]
        %v310 = vld [vmem:[%s276 + $0x68] sm:$0xff]
        %v311 = vld [vmem:[%s276 + $0x70] sm:$0xff]
        %v312 = vld [vmem:[%s276 + $0x78] sm:$0xff]
        %v313 = vld [vmem:[%s276 + $0x80] sm:$0xff]
        %v314 = vld [vmem:[%s276 + $0x88] sm:$0xff]
        %v315 = vld [vmem:[%s276 + $0x90] sm:$0xff]
        %v316 = vld [vmem:[%s276 + $0x98] sm:$0xff]
        %v317 = vld [vmem:[%s276 + $0xa0] sm:$0xff]
        %v318 = vld [vmem:[%s276 + $0xa8] sm:$0xff]
        %v319 = vld [vmem:[%s276 + $0xb0] sm:$0xff]
        %v320 = vld [vmem:[%s276 + $0xb8] sm:$0xff]
        %v321 = vld [vmem:[%s276 + $0xc0] sm:$0xff]
        %v322 = vld [vmem:[%s276 + $0xc8] sm:$0xff]
        %v323 = vld [vmem:[%s276 + $0xd0] sm:$0xff]
        %v324 = vld [vmem:[%s276 + $0xd8] sm:$0xff]
        %v325 = vld [vmem:[%s276 + $0xe0] sm:$0xff]
        %v326 = vld [vmem:[%s276 + $0xe8] sm:$0xff]
        %v327 = vld [vmem:[%s276 + $0xf0] sm:$0xff]
        %v328 = vld [vmem:[%s276 + $0xf8] sm:$0xff]
        %v329 = vld [vmem:[%s276 + $0x100] sm:$0xff]
        %v330 = vld [vmem:[%s276 + $0x108] sm:$0xff]
        %v331 = vld [vmem:[%s276 + $0x110] sm:$0xff]
        %v332 = vld [vmem:[%s276 + $0x118] sm:$0xff]
        %v333 = vld [vmem:[%s276 + $0x120] sm:$0xff]
        %v334 = vld [vmem:[%s276 + $0x128] sm:$0xff]
        %v335 = vld [vmem:[%s276 + $0x130] sm:$0xff]
        %v336 = vld [vmem:[%s276 + $0x138] sm:$0xff]
        %v337 = vld [vmem:[%s276 + $0x140] sm:$0xff]
        %v338 = vld [vmem:[%s276 + $0x148] sm:$0xff]
        %v339 = vld [vmem:[%s276 + $0x150] sm:$0xff]
        %v340 = vld [vmem:[%s276 + $0x158] sm:$0xff]
        %v341 = vld [vmem:[%s276 + $0x160] sm:$0xff]
        %v342 = vld [vmem:[%s276 + $0x168] sm:$0xff]
        %v343 = vld [vmem:[%s276 + $0x170] sm:$0xff]
        %v344 = vld [vmem:[%s276 + $0x178] sm:$0xff]
        %v345 = vld [vmem:[%s276 + $0x180] sm:$0xff]
        %v346 = vld [vmem:[%s276 + $0x188] sm:$0xff]
        %v347 = vld [vmem:[%s276 + $0x190] sm:$0xff]
        %v348 = vld [vmem:[%s276 + $0x198] sm:$0xff]
        %v349 = vld [vmem:[%s276 + $0x1a0] sm:$0xff]
        %v350 = vld [vmem:[%s276 + $0x1a8] sm:$0xff]
        %v351 = vld [vmem:[%s276 + $0x1b0] sm:$0xff]
        %v352 = vld [vmem:[%s276 + $0x1b8] sm:$0xff]
        %v353 = vld [vmem:[%s276 + $0x1c0] sm:$0xff]
        %v354 = vld [vmem:[%s276 + $0x1c8] sm:$0xff]
        %v355 = vld [vmem:[%s276 + $0x1d0] sm:$0xff]
        %v356 = vld [vmem:[%s276 + $0x1d8] sm:$0xff]
        %v357 = vld [vmem:[%s276 + $0x1e0] sm:$0xff]
        %v358 = vld [vmem:[%s276 + $0x1e8] sm:$0xff]
        %v359 = vld [vmem:[%s276 + $0x1f0] sm:$0xff]
        %v360 = vld [vmem:[%s276 + $0x1f8] sm:$0xff]
        %v361 = vld [vmem:[%s282] sm:$0xff]
        %v362 = vld [vmem:[%s282 + $0x8] sm:$0xff]
        %v363 = vld [vmem:[%s282 + $0x10] sm:$0xff]
        %v364 = vld [vmem:[%s282 + $0x18] sm:$0xff]
        %v365 = vld [vmem:[%s282 + $0x20] sm:$0xff]
        %v366 = vld [vmem:[%s282 + $0x28] sm:$0xff]
        %v367 = vld [vmem:[%s282 + $0x30] sm:$0xff]
        %v368 = vld [vmem:[%s282 + $0x38] sm:$0xff]
        %v369 = vld [vmem:[%s282 + $0x40] sm:$0xff]
        %v370 = vld [vmem:[%s282 + $0x48] sm:$0xff]
        %v371 = vld [vmem:[%s282 + $0x50] sm:$0xff]
        %v372 = vld [vmem:[%s282 + $0x58] sm:$0xff]
        %v373 = vld [vmem:[%s282 + $0x60] sm:$0xff]
        %v374 = vld [vmem:[%s282 + $0x68] sm:$0xff]
        %v375 = vld [vmem:[%s282 + $0x70] sm:$0xff]
        %v376 = vld [vmem:[%s282 + $0x78] sm:$0xff]
        %v377 = vmul.f32 %v297, %v297
        %v378 = vmul.f32 %v298, %v298
        %v379 = vmul.f32 %v299, %v299
        %v380 = vmul.f32 %v300, %v300
        %v381 = vmul.f32 %v301, %v301
        %v382 = vmul.f32 %v302, %v302
        %v383 = vmul.f32 %v303, %v303
        %v384 = vmul.f32 %v304, %v304
        %v385 = vmul.f32 %v305, %v305
        %v386 = vmul.f32 %v306, %v306
        %v387 = vmul.f32 %v307, %v307
        %v388 = vmul.f32 %v308, %v308
        %v389 = vmul.f32 %v309, %v309
        %v390 = vmul.f32 %v310, %v310
        %v391 = vmul.f32 %v311, %v311
        %v392 = vmul.f32 %v312, %v312
        %v393 = vmul.f32 %v313, %v313
        %v394 = vmul.f32 %v314, %v314
        %v395 = vmul.f32 %v315, %v315
        %v396 = vmul.f32 %v316, %v316
        %v397 = vmul.f32 %v317, %v317
        %v398 = vmul.f32 %v318, %v318
        %v399 = vmul.f32 %v319, %v319
        %v400 = vmul.f32 %v320, %v320
        %v401 = vmul.f32 %v321, %v321
        %v402 = vmul.f32 %v322, %v322
        %v403 = vmul.f32 %v323, %v323
        %v404 = vmul.f32 %v324, %v324
        %v405 = vmul.f32 %v325, %v325
        %v406 = vmul.f32 %v326, %v326
        %v407 = vmul.f32 %v327, %v327
        %v408 = vmul.f32 %v328, %v328
        %v409 = vmul.f32 %v329, %v329
        %v410 = vmul.f32 %v330, %v330
        %v411 = vmul.f32 %v331, %v331
        %v412 = vmul.f32 %v332, %v332
        %v413 = vmul.f32 %v333, %v333
        %v414 = vmul.f32 %v334, %v334
        %v415 = vmul.f32 %v335, %v335
        %v416 = vmul.f32 %v336, %v336
        %v417 = vmul.f32 %v337, %v337
        %v418 = vmul.f32 %v338, %v338
        %v419 = vmul.f32 %v339, %v339
        %v420 = vmul.f32 %v340, %v340
        %v421 = vmul.f32 %v341, %v341
        %v422 = vmul.f32 %v342, %v342
        %v423 = vmul.f32 %v343, %v343
        %v424 = vmul.f32 %v344, %v344
        %v425 = vmul.f32 %v345, %v345
        %v426 = vmul.f32 %v346, %v346
        %v427 = vmul.f32 %v347, %v347
        %v428 = vmul.f32 %v348, %v348
        %v429 = vmul.f32 %v349, %v349
        %v430 = vmul.f32 %v350, %v350
        %v431 = vmul.f32 %v351, %v351
        %v432 = vmul.f32 %v352, %v352
        %v433 = vmul.f32 %v353, %v353
        %v434 = vmul.f32 %v354, %v354
        %v435 = vmul.f32 %v355, %v355
        %v436 = vmul.f32 %v356, %v356
        %v437 = vmul.f32 %v357, %v357
        %v438 = vmul.f32 %v358, %v358
        %v439 = vmul.f32 %v359, %v359
        %v440 = vmul.f32 %v360, %v360
        %vm441 = vcmask 261120
        %v442 = vsel %vm441, %v377, 0.0
        %443 = vadd.xlane.f32.xlu0 %v442
        %v444 = vpop.xlane.xlu0 %443
        %v445 = vsel %vm441, %v378, 0.0
        %446 = vadd.xlane.f32.xlu0 %v445
        %v447 = vpop.xlane.xlu0 %446
        %v448 = vsel %vm441, %v379, 0.0
        %449 = vadd.xlane.f32.xlu0 %v448
        %v450 = vpop.xlane.xlu0 %449
        %v451 = vsel %vm441, %v380, 0.0
        %452 = vadd.xlane.f32.xlu0 %v451
        %v453 = vpop.xlane.xlu0 %452
        %v454 = vsel %vm441, %v381, 0.0
        %455 = vadd.xlane.f32.xlu0 %v454
        %v456 = vpop.xlane.xlu0 %455
        %v457 = vsel %vm441, %v382, 0.0
        %458 = vadd.xlane.f32.xlu0 %v457
        %v459 = vpop.xlane.xlu0 %458
        %v460 = vsel %vm441, %v383, 0.0
        %461 = vadd.xlane.f32.xlu0 %v460
        %v462 = vpop.xlane.xlu0 %461
        %v463 = vsel %vm441, %v384, 0.0
        %464 = vadd.xlane.f32.xlu0 %v463
        %v465 = vpop.xlane.xlu0 %464
        %v466 = vsel %vm441, %v385, 0.0
        %467 = vadd.xlane.f32.xlu0 %v466
        %v468 = vpop.xlane.xlu0 %467
        %v469 = vsel %vm441, %v386, 0.0
        %470 = vadd.xlane.f32.xlu0 %v469
        %v471 = vpop.xlane.xlu0 %470
        %v472 = vsel %vm441, %v387, 0.0
        %473 = vadd.xlane.f32.xlu0 %v472
        %v474 = vpop.xlane.xlu0 %473
        %v475 = vsel %vm441, %v388, 0.0
        %476 = vadd.xlane.f32.xlu0 %v475
        %v477 = vpop.xlane.xlu0 %476
        %v478 = vsel %vm441, %v389, 0.0
        %479 = vadd.xlane.f32.xlu0 %v478
        %v480 = vpop.xlane.xlu0 %479
        %v481 = vsel %vm441, %v390, 0.0
        %482 = vadd.xlane.f32.xlu0 %v481
        %v483 = vpop.xlane.xlu0 %482
        %v484 = vsel %vm441, %v391, 0.0
        %485 = vadd.xlane.f32.xlu0 %v484
        %v486 = vpop.xlane.xlu0 %485
        %v487 = vsel %vm441, %v392, 0.0
        %488 = vadd.xlane.f32.xlu0 %v487
        %v489 = vpop.xlane.xlu0 %488
        %v490 = vsel %vm441, %v393, 0.0
        %491 = vadd.xlane.f32.xlu0 %v490
        %v492 = vpop.xlane.xlu0 %491
        %v493 = vsel %vm441, %v394, 0.0
        %494 = vadd.xlane.f32.xlu0 %v493
        %v495 = vpop.xlane.xlu0 %494
        %v496 = vsel %vm441, %v395, 0.0
        %497 = vadd.xlane.f32.xlu0 %v496
        %v498 = vpop.xlane.xlu0 %497
        %v499 = vsel %vm441, %v396, 0.0
        %500 = vadd.xlane.f32.xlu0 %v499
        %v501 = vpop.xlane.xlu0 %500
        %v502 = vsel %vm441, %v397, 0.0
        %503 = vadd.xlane.f32.xlu0 %v502
        %v504 = vpop.xlane.xlu0 %503
        %v505 = vsel %vm441, %v398, 0.0
        %506 = vadd.xlane.f32.xlu0 %v505
        %v507 = vpop.xlane.xlu0 %506
        %v508 = vsel %vm441, %v399, 0.0
        %509 = vadd.xlane.f32.xlu0 %v508
        %v510 = vpop.xlane.xlu0 %509
        %v511 = vsel %vm441, %v400, 0.0
        %512 = vadd.xlane.f32.xlu0 %v511
        %v513 = vpop.xlane.xlu0 %512
        %v514 = vsel %vm441, %v401, 0.0
        %515 = vadd.xlane.f32.xlu0 %v514
        %v516 = vpop.xlane.xlu0 %515
        %v517 = vsel %vm441, %v402, 0.0
        %518 = vadd.xlane.f32.xlu0 %v517
        %v519 = vpop.xlane.xlu0 %518
        %v520 = vsel %vm441, %v403, 0.0
        %521 = vadd.xlane.f32.xlu0 %v520
        %v522 = vpop.xlane.xlu0 %521
        %v523 = vsel %vm441, %v404, 0.0
        %524 = vadd.xlane.f32.xlu0 %v523
        %v525 = vpop.xlane.xlu0 %524
        %v526 = vsel %vm441, %v405, 0.0
        %527 = vadd.xlane.f32.xlu0 %v526
        %v528 = vpop.xlane.xlu0 %527
        %v529 = vsel %vm441, %v406, 0.0
        %530 = vadd.xlane.f32.xlu0 %v529
        %v531 = vpop.xlane.xlu0 %530
        %v532 = vsel %vm441, %v407, 0.0
        %533 = vadd.xlane.f32.xlu0 %v532
        %v534 = vpop.xlane.xlu0 %533
        %v535 = vsel %vm441, %v408, 0.0
        %536 = vadd.xlane.f32.xlu0 %v535
        %v537 = vpop.xlane.xlu0 %536
        %v538 = vsel %vm441, %v409, 0.0
        %539 = vadd.xlane.f32.xlu0 %v538
        %v540 = vpop.xlane.xlu0 %539
        %v541 = vsel %vm441, %v410, 0.0
        %542 = vadd.xlane.f32.xlu0 %v541
        %v543 = vpop.xlane.xlu0 %542
        %v544 = vsel %vm441, %v411, 0.0
        %545 = vadd.xlane.f32.xlu0 %v544
        %v546 = vpop.xlane.xlu0 %545
        %v547 = vsel %vm441, %v412, 0.0
        %548 = vadd.xlane.f32.xlu0 %v547
        %v549 = vpop.xlane.xlu0 %548
        %v550 = vsel %vm441, %v413, 0.0
        %551 = vadd.xlane.f32.xlu0 %v550
        %v552 = vpop.xlane.xlu0 %551
        %v553 = vsel %vm441, %v414, 0.0
        %554 = vadd.xlane.f32.xlu0 %v553
        %v555 = vpop.xlane.xlu0 %554
        %v556 = vsel %vm441, %v415, 0.0
        %557 = vadd.xlane.f32.xlu0 %v556
        %v558 = vpop.xlane.xlu0 %557
        %v559 = vsel %vm441, %v416, 0.0
        %560 = vadd.xlane.f32.xlu0 %v559
        %v561 = vpop.xlane.xlu0 %560
        %v562 = vsel %vm441, %v417, 0.0
        %563 = vadd.xlane.f32.xlu0 %v562
        %v564 = vpop.xlane.xlu0 %563
        %v565 = vsel %vm441, %v418, 0.0
        %566 = vadd.xlane.f32.xlu0 %v565
        %v567 = vpop.xlane.xlu0 %566
        %v568 = vsel %vm441, %v419, 0.0
        %569 = vadd.xlane.f32.xlu0 %v568
        %v570 = vpop.xlane.xlu0 %569
        %v571 = vsel %vm441, %v420, 0.0
        %572 = vadd.xlane.f32.xlu0 %v571
        %v573 = vpop.xlane.xlu0 %572
        %v574 = vsel %vm441, %v421, 0.0
        %575 = vadd.xlane.f32.xlu0 %v574
        %v576 = vpop.xlane.xlu0 %575
        %v577 = vsel %vm441, %v422, 0.0
        %578 = vadd.xlane.f32.xlu0 %v577
        %v579 = vpop.xlane.xlu0 %578
        %v580 = vsel %vm441, %v423, 0.0
        %581 = vadd.xlane.f32.xlu0 %v580
        %v582 = vpop.xlane.xlu0 %581
        %v583 = vsel %vm441, %v424, 0.0
        %584 = vadd.xlane.f32.xlu0 %v583
        %v585 = vpop.xlane.xlu0 %584
        %v586 = vsel %vm441, %v425, 0.0
        %587 = vadd.xlane.f32.xlu0 %v586
        %v588 = vpop.xlane.xlu0 %587
        %v589 = vsel %vm441, %v426, 0.0
        %590 = vadd.xlane.f32.xlu0 %v589
        %v591 = vpop.xlane.xlu0 %590
        %v592 = vsel %vm441, %v427, 0.0
        %593 = vadd.xlane.f32.xlu0 %v592
        %v594 = vpop.xlane.xlu0 %593
        %v595 = vsel %vm441, %v428, 0.0
        %596 = vadd.xlane.f32.xlu0 %v595
        %v597 = vpop.xlane.xlu0 %596
        %v598 = vsel %vm441, %v429, 0.0
        %599 = vadd.xlane.f32.xlu0 %v598
        %v600 = vpop.xlane.xlu0 %599
        %v601 = vsel %vm441, %v430, 0.0
        %602 = vadd.xlane.f32.xlu0 %v601
        %v603 = vpop.xlane.xlu0 %602
        %v604 = vsel %vm441, %v431, 0.0
        %605 = vadd.xlane.f32.xlu0 %v604
        %v606 = vpop.xlane.xlu0 %605
        %v607 = vsel %vm441, %v432, 0.0
        %608 = vadd.xlane.f32.xlu0 %v607
        %v609 = vpop.xlane.xlu0 %608
        %v610 = vsel %vm441, %v433, 0.0
        %611 = vadd.xlane.f32.xlu0 %v610
        %v612 = vpop.xlane.xlu0 %611
        %v613 = vsel %vm441, %v434, 0.0
        %614 = vadd.xlane.f32.xlu0 %v613
        %v615 = vpop.xlane.xlu0 %614
        %v616 = vsel %vm441, %v435, 0.0
        %617 = vadd.xlane.f32.xlu0 %v616
        %v618 = vpop.xlane.xlu0 %617
        %v619 = vsel %vm441, %v436, 0.0
        %620 = vadd.xlane.f32.xlu0 %v619
        %v621 = vpop.xlane.xlu0 %620
        %v622 = vsel %vm441, %v437, 0.0
        %623 = vadd.xlane.f32.xlu0 %v622
        %v624 = vpop.xlane.xlu0 %623
        %v625 = vsel %vm441, %v438, 0.0
        %626 = vadd.xlane.f32.xlu0 %v625
        %v627 = vpop.xlane.xlu0 %626
        %v628 = vsel %vm441, %v439, 0.0
        %629 = vadd.xlane.f32.xlu0 %v628
        %v630 = vpop.xlane.xlu0 %629
        %v631 = vsel %vm441, %v440, 0.0
        %632 = vadd.xlane.f32.xlu0 %v631
        %v633 = vpop.xlane.xlu0 %632
        %v634 = vmul.f32 %v361, %v361
        %v635 = vmul.f32 %v362, %v362
        %v636 = vmul.f32 %v363, %v363
        %v637 = vmul.f32 %v364, %v364
        %v638 = vmul.f32 %v365, %v365
        %v639 = vmul.f32 %v366, %v366
        %v640 = vmul.f32 %v367, %v367
        %v641 = vmul.f32 %v368, %v368
        %v642 = vmul.f32 %v369, %v369
        %v643 = vmul.f32 %v370, %v370
        %v644 = vmul.f32 %v371, %v371
        %v645 = vmul.f32 %v372, %v372
        %v646 = vmul.f32 %v373, %v373
        %v647 = vmul.f32 %v374, %v374
        %v648 = vmul.f32 %v375, %v375
        %v649 = vmul.f32 %v376, %v376
        %v650 = vsel %vm441, %v634, 0.0
        %651 = vadd.xlane.f32.xlu0 %v650
        %v652 = vpop.xlane.xlu0 %651
        %v653 = vsel %vm441, %v635, 0.0
        %654 = vadd.xlane.f32.xlu0 %v653
        %v655 = vpop.xlane.xlu0 %654
        %v656 = vsel %vm441, %v636, 0.0
        %657 = vadd.xlane.f32.xlu0 %v656
        %v658 = vpop.xlane.xlu0 %657
        %v659 = vsel %vm441, %v637, 0.0
        %660 = vadd.xlane.f32.xlu0 %v659
        %v661 = vpop.xlane.xlu0 %660
        %v662 = vsel %vm441, %v638, 0.0
        %663 = vadd.xlane.f32.xlu0 %v662
        %v664 = vpop.xlane.xlu0 %663
        %v665 = vsel %vm441, %v639, 0.0
        %666 = vadd.xlane.f32.xlu0 %v665
        %v667 = vpop.xlane.xlu0 %666
        %v668 = vsel %vm441, %v640, 0.0
        %669 = vadd.xlane.f32.xlu0 %v668
        %v670 = vpop.xlane.xlu0 %669
        %v671 = vsel %vm441, %v641, 0.0
        %672 = vadd.xlane.f32.xlu0 %v671
        %v673 = vpop.xlane.xlu0 %672
        %v674 = vsel %vm441, %v642, 0.0
        %675 = vadd.xlane.f32.xlu0 %v674
        %v676 = vpop.xlane.xlu0 %675
        %v677 = vsel %vm441, %v643, 0.0
        %678 = vadd.xlane.f32.xlu0 %v677
        %v679 = vpop.xlane.xlu0 %678
        %v680 = vsel %vm441, %v644, 0.0
        %681 = vadd.xlane.f32.xlu0 %v680
        %v682 = vpop.xlane.xlu0 %681
        %v683 = vsel %vm441, %v645, 0.0
        %684 = vadd.xlane.f32.xlu0 %v683
        %v685 = vpop.xlane.xlu0 %684
        %v686 = vsel %vm441, %v646, 0.0
        %687 = vadd.xlane.f32.xlu0 %v686
        %v688 = vpop.xlane.xlu0 %687
        %v689 = vsel %vm441, %v647, 0.0
        %690 = vadd.xlane.f32.xlu0 %v689
        %v691 = vpop.xlane.xlu0 %690
        %v692 = vsel %vm441, %v648, 0.0
        %693 = vadd.xlane.f32.xlu0 %v692
        %v694 = vpop.xlane.xlu0 %693
        %v695 = vsel %vm441, %v649, 0.0
        %696 = vadd.xlane.f32.xlu0 %v695
        %v697 = vpop.xlane.xlu0 %696
        %v698 = vmax.f32 %v444, 1e-24
        %v699 = vmax.f32 %v447, 1e-24
        %v700 = vmax.f32 %v450, 1e-24
        %v701 = vmax.f32 %v453, 1e-24
        %v702 = vmax.f32 %v456, 1e-24
        %v703 = vmax.f32 %v459, 1e-24
        %v704 = vmax.f32 %v462, 1e-24
        %v705 = vmax.f32 %v465, 1e-24
        %v706 = vmax.f32 %v468, 1e-24
        %v707 = vmax.f32 %v471, 1e-24
        %v708 = vmax.f32 %v474, 1e-24
        %v709 = vmax.f32 %v477, 1e-24
        %v710 = vmax.f32 %v480, 1e-24
        %v711 = vmax.f32 %v483, 1e-24
        %v712 = vmax.f32 %v486, 1e-24
        %v713 = vmax.f32 %v489, 1e-24
        %v714 = vmax.f32 %v492, 1e-24
        %v715 = vmax.f32 %v495, 1e-24
        %v716 = vmax.f32 %v498, 1e-24
        %v717 = vmax.f32 %v501, 1e-24
        %v718 = vmax.f32 %v504, 1e-24
        %v719 = vmax.f32 %v507, 1e-24
        %v720 = vmax.f32 %v510, 1e-24
        %v721 = vmax.f32 %v513, 1e-24
        %v722 = vmax.f32 %v516, 1e-24
        %v723 = vmax.f32 %v519, 1e-24
        %v724 = vmax.f32 %v522, 1e-24
        %v725 = vmax.f32 %v525, 1e-24
        %v726 = vmax.f32 %v528, 1e-24
        %v727 = vmax.f32 %v531, 1e-24
        %v728 = vmax.f32 %v534, 1e-24
        %v729 = vmax.f32 %v537, 1e-24
        %v730 = vmax.f32 %v540, 1e-24
        %v731 = vmax.f32 %v543, 1e-24
        %v732 = vmax.f32 %v546, 1e-24
        %v733 = vmax.f32 %v549, 1e-24
        %v734 = vmax.f32 %v552, 1e-24
        %v735 = vmax.f32 %v555, 1e-24
        %v736 = vmax.f32 %v558, 1e-24
        %v737 = vmax.f32 %v561, 1e-24
        %v738 = vmax.f32 %v564, 1e-24
        %v739 = vmax.f32 %v567, 1e-24
        %v740 = vmax.f32 %v570, 1e-24
        %v741 = vmax.f32 %v573, 1e-24
        %v742 = vmax.f32 %v576, 1e-24
        %v743 = vmax.f32 %v579, 1e-24
        %v744 = vmax.f32 %v582, 1e-24
        %v745 = vmax.f32 %v585, 1e-24
        %v746 = vmax.f32 %v588, 1e-24
        %v747 = vmax.f32 %v591, 1e-24
        %v748 = vmax.f32 %v594, 1e-24
        %v749 = vmax.f32 %v597, 1e-24
        %v750 = vmax.f32 %v600, 1e-24
        %v751 = vmax.f32 %v603, 1e-24
        %v752 = vmax.f32 %v606, 1e-24
        %v753 = vmax.f32 %v609, 1e-24
        %v754 = vmax.f32 %v612, 1e-24
        %v755 = vmax.f32 %v615, 1e-24
        %v756 = vmax.f32 %v618, 1e-24
        %v757 = vmax.f32 %v621, 1e-24
        %v758 = vmax.f32 %v624, 1e-24
        %v759 = vmax.f32 %v627, 1e-24
        %v760 = vmax.f32 %v630, 1e-24
        %v761 = vmax.f32 %v633, 1e-24
        %v762 = vrsqrt.pop %v698
        %v763 = vrsqrt.pop %v699
        %v764 = vrsqrt.pop %v700
        %v765 = vrsqrt.pop %v701
        %v766 = vrsqrt.pop %v702
        %v767 = vrsqrt.pop %v703
        %v768 = vrsqrt.pop %v704
        %v769 = vrsqrt.pop %v705
        %v770 = vrsqrt.pop %v706
        %v771 = vrsqrt.pop %v707
        %v772 = vrsqrt.pop %v708
        %v773 = vrsqrt.pop %v709
        %v774 = vrsqrt.pop %v710
        %v775 = vrsqrt.pop %v711
        %v776 = vrsqrt.pop %v712
        %v777 = vrsqrt.pop %v713
        %v778 = vrsqrt.pop %v714
        %v779 = vrsqrt.pop %v715
        %v780 = vrsqrt.pop %v716
        %v781 = vrsqrt.pop %v717
        %v782 = vrsqrt.pop %v718
        %v783 = vrsqrt.pop %v719
        %v784 = vrsqrt.pop %v720
        %v785 = vrsqrt.pop %v721
        %v786 = vrsqrt.pop %v722
        %v787 = vrsqrt.pop %v723
        %v788 = vrsqrt.pop %v724
        %v789 = vrsqrt.pop %v725
        %v790 = vrsqrt.pop %v726
        %v791 = vrsqrt.pop %v727
        %v792 = vrsqrt.pop %v728
        %v793 = vrsqrt.pop %v729
        %v794 = vrsqrt.pop %v730
        %v795 = vrsqrt.pop %v731
        %v796 = vrsqrt.pop %v732
        %v797 = vrsqrt.pop %v733
        %v798 = vrsqrt.pop %v734
        %v799 = vrsqrt.pop %v735
        %v800 = vrsqrt.pop %v736
        %v801 = vrsqrt.pop %v737
        %v802 = vrsqrt.pop %v738
        %v803 = vrsqrt.pop %v739
        %v804 = vrsqrt.pop %v740
        %v805 = vrsqrt.pop %v741
        %v806 = vrsqrt.pop %v742
        %v807 = vrsqrt.pop %v743
        %v808 = vrsqrt.pop %v744
        %v809 = vrsqrt.pop %v745
        %v810 = vrsqrt.pop %v746
        %v811 = vrsqrt.pop %v747
        %v812 = vrsqrt.pop %v748
        %v813 = vrsqrt.pop %v749
        %v814 = vrsqrt.pop %v750
        %v815 = vrsqrt.pop %v751
        %v816 = vrsqrt.pop %v752
        %v817 = vrsqrt.pop %v753
        %v818 = vrsqrt.pop %v754
        %v819 = vrsqrt.pop %v755
        %v820 = vrsqrt.pop %v756
        %v821 = vrsqrt.pop %v757
        %v822 = vrsqrt.pop %v758
        %v823 = vrsqrt.pop %v759
        %v824 = vrsqrt.pop %v760
        %v825 = vrsqrt.pop %v761
        %v826 = vmul.f32 %v762, 5.0
        %v827 = vmul.f32 %v763, 5.0
        %v828 = vmul.f32 %v764, 5.0
        %v829 = vmul.f32 %v765, 5.0
        %v830 = vmul.f32 %v766, 5.0
        %v831 = vmul.f32 %v767, 5.0
        %v832 = vmul.f32 %v768, 5.0
        %v833 = vmul.f32 %v769, 5.0
        %v834 = vmul.f32 %v770, 5.0
        %v835 = vmul.f32 %v771, 5.0
        %v836 = vmul.f32 %v772, 5.0
        %v837 = vmul.f32 %v773, 5.0
        %v838 = vmul.f32 %v774, 5.0
        %v839 = vmul.f32 %v775, 5.0
        %v840 = vmul.f32 %v776, 5.0
        %v841 = vmul.f32 %v777, 5.0
        %v842 = vmul.f32 %v778, 5.0
        %v843 = vmul.f32 %v779, 5.0
        %v844 = vmul.f32 %v780, 5.0
        %v845 = vmul.f32 %v781, 5.0
        %v846 = vmul.f32 %v782, 5.0
        %v847 = vmul.f32 %v783, 5.0
        %v848 = vmul.f32 %v784, 5.0
        %v849 = vmul.f32 %v785, 5.0
        %v850 = vmul.f32 %v786, 5.0
        %v851 = vmul.f32 %v787, 5.0
        %v852 = vmul.f32 %v788, 5.0
        %v853 = vmul.f32 %v789, 5.0
        %v854 = vmul.f32 %v790, 5.0
        %v855 = vmul.f32 %v791, 5.0
        %v856 = vmul.f32 %v792, 5.0
        %v857 = vmul.f32 %v793, 5.0
        %v858 = vmul.f32 %v794, 5.0
        %v859 = vmul.f32 %v795, 5.0
        %v860 = vmul.f32 %v796, 5.0
        %v861 = vmul.f32 %v797, 5.0
        %v862 = vmul.f32 %v798, 5.0
        %v863 = vmul.f32 %v799, 5.0
        %v864 = vmul.f32 %v800, 5.0
        %v865 = vmul.f32 %v801, 5.0
        %v866 = vmul.f32 %v802, 5.0
        %v867 = vmul.f32 %v803, 5.0
        %v868 = vmul.f32 %v804, 5.0
        %v869 = vmul.f32 %v805, 5.0
        %v870 = vmul.f32 %v806, 5.0
        %v871 = vmul.f32 %v807, 5.0
        %v872 = vmul.f32 %v808, 5.0
        %v873 = vmul.f32 %v809, 5.0
        %v874 = vmul.f32 %v810, 5.0
        %v875 = vmul.f32 %v811, 5.0
        %v876 = vmul.f32 %v812, 5.0
        %v877 = vmul.f32 %v813, 5.0
        %v878 = vmul.f32 %v814, 5.0
        %v879 = vmul.f32 %v815, 5.0
        %v880 = vmul.f32 %v816, 5.0
        %v881 = vmul.f32 %v817, 5.0
        %v882 = vmul.f32 %v818, 5.0
        %v883 = vmul.f32 %v819, 5.0
        %v884 = vmul.f32 %v820, 5.0
        %v885 = vmul.f32 %v821, 5.0
        %v886 = vmul.f32 %v822, 5.0
        %v887 = vmul.f32 %v823, 5.0
        %v888 = vmul.f32 %v824, 5.0
        %v889 = vmul.f32 %v825, 5.0
        %v890 = vmul.f32 %v297, %v826
        %v891 = vmul.f32 %v298, %v827
        %v892 = vmul.f32 %v299, %v828
        %v893 = vmul.f32 %v300, %v829
        %v894 = vmul.f32 %v301, %v830
        %v895 = vmul.f32 %v302, %v831
        %v896 = vmul.f32 %v303, %v832
        %v897 = vmul.f32 %v304, %v833
        %v898 = vmul.f32 %v305, %v834
        %v899 = vmul.f32 %v306, %v835
        %v900 = vmul.f32 %v307, %v836
        %v901 = vmul.f32 %v308, %v837
        %v902 = vmul.f32 %v309, %v838
        %v903 = vmul.f32 %v310, %v839
        %v904 = vmul.f32 %v311, %v840
        %v905 = vmul.f32 %v312, %v841
        %v906 = vmul.f32 %v313, %v842
        %v907 = vmul.f32 %v314, %v843
        %v908 = vmul.f32 %v315, %v844
        %v909 = vmul.f32 %v316, %v845
        %v910 = vmul.f32 %v317, %v846
        %v911 = vmul.f32 %v318, %v847
        %v912 = vmul.f32 %v319, %v848
        %v913 = vmul.f32 %v320, %v849
        %v914 = vmul.f32 %v321, %v850
        %v915 = vmul.f32 %v322, %v851
        %v916 = vmul.f32 %v323, %v852
        %v917 = vmul.f32 %v324, %v853
        %v918 = vmul.f32 %v325, %v854
        %v919 = vmul.f32 %v326, %v855
        %v920 = vmul.f32 %v327, %v856
        %v921 = vmul.f32 %v328, %v857
        %v922 = vmul.f32 %v329, %v858
        %v923 = vmul.f32 %v330, %v859
        %v924 = vmul.f32 %v331, %v860
        %v925 = vmul.f32 %v332, %v861
        %v926 = vmul.f32 %v333, %v862
        %v927 = vmul.f32 %v334, %v863
        %v928 = vmul.f32 %v335, %v864
        %v929 = vmul.f32 %v336, %v865
        %v930 = vmul.f32 %v337, %v866
        %v931 = vmul.f32 %v338, %v867
        %v932 = vmul.f32 %v339, %v868
        %v933 = vmul.f32 %v340, %v869
        %v934 = vmul.f32 %v341, %v870
        %v935 = vmul.f32 %v342, %v871
        %v936 = vmul.f32 %v343, %v872
        %v937 = vmul.f32 %v344, %v873
        %v938 = vmul.f32 %v345, %v874
        %v939 = vmul.f32 %v346, %v875
        %v940 = vmul.f32 %v347, %v876
        %v941 = vmul.f32 %v348, %v877
        %v942 = vmul.f32 %v349, %v878
        %v943 = vmul.f32 %v350, %v879
        %v944 = vmul.f32 %v351, %v880
        %v945 = vmul.f32 %v352, %v881
        %v946 = vmul.f32 %v353, %v882
        %v947 = vmul.f32 %v354, %v883
        %v948 = vmul.f32 %v355, %v884
        %v949 = vmul.f32 %v356, %v885
        %v950 = vmul.f32 %v357, %v886
        %v951 = vmul.f32 %v358, %v887
        %v952 = vmul.f32 %v359, %v888
        %v953 = vmul.f32 %v360, %v889
        %v954 = vmax.f32 %v652, 1e-24
        %v955 = vmax.f32 %v655, 1e-24
        %v956 = vmax.f32 %v658, 1e-24
        %v957 = vmax.f32 %v661, 1e-24
        %v958 = vmax.f32 %v664, 1e-24
        %v959 = vmax.f32 %v667, 1e-24
        %v960 = vmax.f32 %v670, 1e-24
        %v961 = vmax.f32 %v673, 1e-24
        %v962 = vmax.f32 %v676, 1e-24
        %v963 = vmax.f32 %v679, 1e-24
        %v964 = vmax.f32 %v682, 1e-24
        %v965 = vmax.f32 %v685, 1e-24
        %v966 = vmax.f32 %v688, 1e-24
        %v967 = vmax.f32 %v691, 1e-24
        %v968 = vmax.f32 %v694, 1e-24
        %v969 = vmax.f32 %v697, 1e-24
        %v970 = vrsqrt.pop %v954
        %v971 = vrsqrt.pop %v955
        %v972 = vrsqrt.pop %v956
        %v973 = vrsqrt.pop %v957
        %v974 = vrsqrt.pop %v958
        %v975 = vrsqrt.pop %v959
        %v976 = vrsqrt.pop %v960
        %v977 = vrsqrt.pop %v961
        %v978 = vrsqrt.pop %v962
        %v979 = vrsqrt.pop %v963
        %v980 = vrsqrt.pop %v964
        %v981 = vrsqrt.pop %v965
        %v982 = vrsqrt.pop %v966
        %v983 = vrsqrt.pop %v967
        %v984 = vrsqrt.pop %v968
        %v985 = vrsqrt.pop %v969
        %v986 = vmul.f32 %v361, %v970
        %v987 = vmul.f32 %v362, %v971
        %v988 = vmul.f32 %v363, %v972
        %v989 = vmul.f32 %v364, %v973
        %v990 = vmul.f32 %v365, %v974
        %v991 = vmul.f32 %v366, %v975
        %v992 = vmul.f32 %v367, %v976
        %v993 = vmul.f32 %v368, %v977
        %v994 = vmul.f32 %v369, %v978
        %v995 = vmul.f32 %v370, %v979
        %v996 = vmul.f32 %v371, %v980
        %v997 = vmul.f32 %v372, %v981
        %v998 = vmul.f32 %v373, %v982
        %v999 = vmul.f32 %v374, %v983
        %v1000 = vmul.f32 %v375, %v984
        %v1001 = vmul.f32 %v376, %v985
        %v1003 = vsel %vm441, %v890, 0
        %v1006 = vsel %vm441, %v891, 0
        %v1009 = vsel %vm441, %v892, 0
        %v1012 = vsel %vm441, %v893, 0
        %v1015 = vsel %vm441, %v894, 0
        %v1018 = vsel %vm441, %v895, 0
        %v1021 = vsel %vm441, %v896, 0
        %v1024 = vsel %vm441, %v897, 0
        %v1027 = vsel %vm441, %v898, 0
        %v1030 = vsel %vm441, %v899, 0
        %v1033 = vsel %vm441, %v900, 0
        %v1036 = vsel %vm441, %v901, 0
        %v1039 = vsel %vm441, %v902, 0
        %v1042 = vsel %vm441, %v903, 0
        %v1045 = vsel %vm441, %v904, 0
        %v1048 = vsel %vm441, %v905, 0
        %v1051 = vsel %vm441, %v906, 0
        %v1054 = vsel %vm441, %v907, 0
        %v1057 = vsel %vm441, %v908, 0
        %v1060 = vsel %vm441, %v909, 0
        %v1063 = vsel %vm441, %v910, 0
        %v1066 = vsel %vm441, %v911, 0
        %v1069 = vsel %vm441, %v912, 0
        %v1072 = vsel %vm441, %v913, 0
        %v1075 = vsel %vm441, %v914, 0
        %v1078 = vsel %vm441, %v915, 0
        %v1081 = vsel %vm441, %v916, 0
        %v1084 = vsel %vm441, %v917, 0
        %v1087 = vsel %vm441, %v918, 0
        %v1090 = vsel %vm441, %v919, 0
        %v1093 = vsel %vm441, %v920, 0
        %v1096 = vsel %vm441, %v921, 0
        %v1099 = vsel %vm441, %v922, 0
        %v1102 = vsel %vm441, %v923, 0
        %v1105 = vsel %vm441, %v924, 0
        %v1108 = vsel %vm441, %v925, 0
        %v1111 = vsel %vm441, %v926, 0
        %v1114 = vsel %vm441, %v927, 0
        %v1117 = vsel %vm441, %v928, 0
        %v1120 = vsel %vm441, %v929, 0
        %v1123 = vsel %vm441, %v930, 0
        %v1126 = vsel %vm441, %v931, 0
        %v1129 = vsel %vm441, %v932, 0
        %v1132 = vsel %vm441, %v933, 0
        %v1135 = vsel %vm441, %v934, 0
        %v1138 = vsel %vm441, %v935, 0
        %v1141 = vsel %vm441, %v936, 0
        %v1144 = vsel %vm441, %v937, 0
        %v1147 = vsel %vm441, %v938, 0
        %v1150 = vsel %vm441, %v939, 0
        %v1153 = vsel %vm441, %v940, 0
        %v1156 = vsel %vm441, %v941, 0
        %v1159 = vsel %vm441, %v942, 0
        %v1162 = vsel %vm441, %v943, 0
        %v1165 = vsel %vm441, %v944, 0
        %v1168 = vsel %vm441, %v945, 0
        %v1171 = vsel %vm441, %v946, 0
        %v1174 = vsel %vm441, %v947, 0
        %v1177 = vsel %vm441, %v948, 0
        %v1180 = vsel %vm441, %v949, 0
        %v1183 = vsel %vm441, %v950, 0
        %v1186 = vsel %vm441, %v951, 0
        %v1189 = vsel %vm441, %v952, 0
        %v1192 = vsel %vm441, %v953, 0
        %v1195 = vsel %vm441, %v986, 0
        %v1198 = vsel %vm441, %v987, 0
        %v1201 = vsel %vm441, %v988, 0
        %v1204 = vsel %vm441, %v989, 0
        %v1207 = vsel %vm441, %v990, 0
        %v1210 = vsel %vm441, %v991, 0
        %v1213 = vsel %vm441, %v992, 0
        %v1216 = vsel %vm441, %v993, 0
        %v1219 = vsel %vm441, %v994, 0
        %v1222 = vsel %vm441, %v995, 0
        %v1225 = vsel %vm441, %v996, 0
        %v1228 = vsel %vm441, %v997, 0
        %v1231 = vsel %vm441, %v998, 0
        %v1234 = vsel %vm441, %v999, 0
        %v1237 = vsel %vm441, %v1000, 0
        %v1240 = vsel %vm441, %v1001, 0
        %1242 = vmatprep.subr.mxu0 0.0
        %1243 = vmatpush1.xpose.msra.mxu0 %v1195
        %1244 = vmatprep.subr.mxu0 0.0
        %1245 = vmatpush1.xpose.msra.mxu0 %v1198
        %1246 = vmatprep.subr.mxu0 0.0
        %1247 = vmatpush1.xpose.msra.mxu0 %v1201
        %1248 = vmatprep.subr.mxu0 0.0
        %1249 = vmatpush1.xpose.msra.mxu0 %v1204
        %1250 = vmatprep.subr.mxu0 0.0
        %1251 = vmatpush1.xpose.msra.mxu0 %v1207
        %1252 = vmatprep.subr.mxu0 0.0
        %1253 = vmatpush1.xpose.msra.mxu0 %v1210
        %1254 = vmatprep.subr.mxu0 0.0
        %1255 = vmatpush1.xpose.msra.mxu0 %v1213
        %1256 = vmatprep.subr.mxu0 0.0
        %1257 = vmatpush1.xpose.msra.mxu0 %v1216
        %1258 = vmatprep.subr.mxu0 0.0
        %1259 = vmatpush1.xpose.msra.mxu0 %v1219
        %1260 = vmatprep.subr.mxu0 0.0
        %1261 = vmatpush1.xpose.msra.mxu0 %v1222
        %1262 = vmatprep.subr.mxu0 0.0
        %1263 = vmatpush1.xpose.msra.mxu0 %v1225
        %1264 = vmatprep.subr.mxu0 0.0
        %1265 = vmatpush1.xpose.msra.mxu0 %v1228
        %1266 = vmatprep.subr.mxu0 0.0
        %1267 = vmatpush1.xpose.msra.mxu0 %v1231
        %1268 = vmatprep.subr.mxu0 0.0
        %1269 = vmatpush1.xpose.msra.mxu0 %v1234
        %1270 = vmatprep.subr.mxu0 0.0
        %1271 = vmatpush1.xpose.msra.mxu0 %v1237
        %1272 = vmatprep.subr.mxu0 0.0
        %1273 = vmatpush1.xpose.msra.mxu0 %v1240
        %1274 = vmatprep.subr.mxu0 0.0
        %1275 = vmatpush1.xpose.msra.mxu0 0.0
        %1276 = vmatprep.subr.mxu0 0.0
        %1277 = vmatpush1.xpose.msra.mxu0 0.0
        %1278 = vmatprep.subr.mxu0 0.0
        %1279 = vmatpush1.xpose.msra.mxu0 0.0
        %1280 = vmatprep.subr.mxu0 0.0
        %1281 = vmatpush1.xpose.msra.mxu0 0.0
        %1282 = vmatprep.subr.mxu0 0.0
        %1283 = vmatpush1.xpose.msra.mxu0 0.0
        %1284 = vmatprep.subr.mxu0 0.0
        %1285 = vmatpush1.xpose.msra.mxu0 0.0
        %1286 = vmatprep.subr.mxu0 0.0
        %1287 = vmatpush1.xpose.msra.mxu0 0.0
        %1288 = vmatprep.subr.mxu0 0.0
        %1289 = vmatpush1.xpose.msra.mxu0 0.0
        %1290 = vmatprep.subr.mxu0 0.0
        %1291 = vmatpush1.xpose.msra.mxu0 0.0
        %1292 = vmatprep.subr.mxu0 0.0
        %1293 = vmatpush1.xpose.msra.mxu0 0.0
        %1294 = vmatprep.subr.mxu0 0.0
        %1295 = vmatpush1.xpose.msra.mxu0 0.0
        %1296 = vmatprep.subr.mxu0 0.0
        %1297 = vmatpush1.xpose.msra.mxu0 0.0
        %1298 = vmatprep.subr.mxu0 0.0
        %1299 = vmatpush1.xpose.msra.mxu0 0.0
        %1300 = vmatprep.subr.mxu0 0.0
        %1301 = vmatpush1.xpose.msra.mxu0 0.0
        %1302 = vmatprep.subr.mxu0 0.0
        %1303 = vmatpush1.xpose.msra.mxu0 0.0
        %1304 = vmatprep.subr.mxu0 0.0
        %1305 = vmatpush1.xpose.msra.mxu0 0.0
        %1306 = vmatprep.mubr.f32.mxu0 0.0
        %1307 = vmatmul.mubr.f32.gmra.mrb[0].mxu0 %v1003
        %v1308 = vpop.f32.mrb[0].mxu0
        %v1309 = vadd.f32 0.0, %v1308
        %v1310 = vpop.f32.mrb[0].mxu0
        %1311 = vmatprep.mubr.f32.mxu0 0.0
        %1312 = vmatmul.mubr.f32.gmra.mrb[0].mxu0 %v1006
        %v1313 = vpop.f32.mrb[0].mxu0
        %v1314 = vadd.f32 0.0, %v1313
        %v1315 = vpop.f32.mrb[0].mxu0
        %1316 = vmatprep.mubr.f32.mxu0 0.0
        %1317 = vmatmul.mubr.f32.gmra.mrb[0].mxu0 %v1009
        %v1318 = vpop.f32.mrb[0].mxu0
        %v1319 = vadd.f32 0.0, %v1318
        %v1320 = vpop.f32.mrb[0].mxu0
        %1321 = vmatprep.mubr.f32.mxu0 0.0
        %1322 = vmatmul.mubr.f32.gmra.mrb[0].mxu0 %v1012
        %v1323 = vpop.f32.mrb[0].mxu0
        %v1324 = vadd.f32 0.0, %v1323
        %v1325 = vpop.f32.mrb[0].mxu0
        %1326 = vmatprep.mubr.f32.mxu0 0.0
        %1327 = vmatmul.mubr.f32.gmra.mrb[0].mxu0 %v1015
        %v1328 = vpop.f32.mrb[0].mxu0
        %v1329 = vadd.f32 0.0, %v1328
        %v1330 = vpop.f32.mrb[0].mxu0
        %1331 = vmatprep.mubr.f32.mxu0 0.0
        %1332 = vmatmul.mubr.f32.gmra.mrb[0].mxu0 %v1018
        %v1333 = vpop.f32.mrb[0].mxu0
        %v1334 = vadd.f32 0.0, %v1333
        %v1335 = vpop.f32.mrb[0].mxu0
        %1336 = vmatprep.mubr.f32.mxu0 0.0
        %1337 = vmatmul.mubr.f32.gmra.mrb[0].mxu0 %v1021
        %v1338 = vpop.f32.mrb[0].mxu0
        %v1339 = vadd.f32 0.0, %v1338
        %v1340 = vpop.f32.mrb[0].mxu0
        %1341 = vmatprep.mubr.f32.mxu0 0.0
        %1342 = vmatmul.mubr.f32.gmra.mrb[0].mxu0 %v1024
        %v1343 = vpop.f32.mrb[0].mxu0
        %v1344 = vadd.f32 0.0, %v1343
        %v1345 = vpop.f32.mrb[0].mxu0
        %1346 = vmatprep.mubr.f32.mxu0 0.0
        %1347 = vmatmul.mubr.f32.gmra.mrb[0].mxu0 %v1027
        %v1348 = vpop.f32.mrb[0].mxu0
        %v1349 = vadd.f32 0.0, %v1348
        %v1350 = vpop.f32.mrb[0].mxu0
        %1351 = vmatprep.mubr.f32.mxu0 0.0
        %1352 = vmatmul.mubr.f32.gmra.mrb[0].mxu0 %v1030
        %v1353 = vpop.f32.mrb[0].mxu0
        %v1354 = vadd.f32 0.0, %v1353
        %v1355 = vpop.f32.mrb[0].mxu0
        %1356 = vmatprep.mubr.f32.mxu0 0.0
        %1357 = vmatmul.mubr.f32.gmra.mrb[0].mxu0 %v1033
        %v1358 = vpop.f32.mrb[0].mxu0
        %v1359 = vadd.f32 0.0, %v1358
        %v1360 = vpop.f32.mrb[0].mxu0
        %1361 = vmatprep.mubr.f32.mxu0 0.0
        %1362 = vmatmul.mubr.f32.gmra.mrb[0].mxu0 %v1036
        %v1363 = vpop.f32.mrb[0].mxu0
        %v1364 = vadd.f32 0.0, %v1363
        %v1365 = vpop.f32.mrb[0].mxu0
        %1366 = vmatprep.mubr.f32.mxu0 0.0
        %1367 = vmatmul.mubr.f32.gmra.mrb[0].mxu0 %v1039
        %v1368 = vpop.f32.mrb[0].mxu0
        %v1369 = vadd.f32 0.0, %v1368
        %v1370 = vpop.f32.mrb[0].mxu0
        %1371 = vmatprep.mubr.f32.mxu0 0.0
        %1372 = vmatmul.mubr.f32.gmra.mrb[0].mxu0 %v1042
        %v1373 = vpop.f32.mrb[0].mxu0
        %v1374 = vadd.f32 0.0, %v1373
        %v1375 = vpop.f32.mrb[0].mxu0
        %1376 = vmatprep.mubr.f32.mxu0 0.0
        %1377 = vmatmul.mubr.f32.gmra.mrb[0].mxu0 %v1045
        %v1378 = vpop.f32.mrb[0].mxu0
        %v1379 = vadd.f32 0.0, %v1378
        %v1380 = vpop.f32.mrb[0].mxu0
        %1381 = vmatprep.mubr.f32.mxu0 0.0
        %1382 = vmatmul.mubr.f32.gmra.mrb[0].mxu0 %v1048
        %v1383 = vpop.f32.mrb[0].mxu0
        %v1384 = vadd.f32 0.0, %v1383
        %v1385 = vpop.f32.mrb[0].mxu0
        %1386 = vmatprep.mubr.f32.mxu0 0.0
        %1387 = vmatmul.mubr.f32.gmra.mrb[0].mxu0 %v1051
        %v1388 = vpop.f32.mrb[0].mxu0
        %v1389 = vadd.f32 0.0, %v1388
        %v1390 = vpop.f32.mrb[0].mxu0
        %1391 = vmatprep.mubr.f32.mxu0 0.0
        %1392 = vmatmul.mubr.f32.gmra.mrb[0].mxu0 %v1054
        %v1393 = vpop.f32.mrb[0].mxu0
        %v1394 = vadd.f32 0.0, %v1393
        %v1395 = vpop.f32.mrb[0].mxu0
        %1396 = vmatprep.mubr.f32.mxu0 0.0
        %1397 = vmatmul.mubr.f32.gmra.mrb[0].mxu0 %v1057
        %v1398 = vpop.f32.mrb[0].mxu0
        %v1399 = vadd.f32 0.0, %v1398
        %v1400 = vpop.f32.mrb[0].mxu0
        %1401 = vmatprep.mubr.f32.mxu0 0.0
        %1402 = vmatmul.mubr.f32.gmra.mrb[0].mxu0 %v1060
        %v1403 = vpop.f32.mrb[0].mxu0
        %v1404 = vadd.f32 0.0, %v1403
        %v1405 = vpop.f32.mrb[0].mxu0
        %1406 = vmatprep.mubr.f32.mxu0 0.0
        %1407 = vmatmul.mubr.f32.gmra.mrb[0].mxu0 %v1063
        %v1408 = vpop.f32.mrb[0].mxu0
        %v1409 = vadd.f32 0.0, %v1408
        %v1410 = vpop.f32.mrb[0].mxu0
        %1411 = vmatprep.mubr.f32.mxu0 0.0
        %1412 = vmatmul.mubr.f32.gmra.mrb[0].mxu0 %v1066
        %v1413 = vpop.f32.mrb[0].mxu0
        %v1414 = vadd.f32 0.0, %v1413
        %v1415 = vpop.f32.mrb[0].mxu0
        %1416 = vmatprep.mubr.f32.mxu0 0.0
        %1417 = vmatmul.mubr.f32.gmra.mrb[0].mxu0 %v1069
        %v1418 = vpop.f32.mrb[0].mxu0
        %v1419 = vadd.f32 0.0, %v1418
        %v1420 = vpop.f32.mrb[0].mxu0
        %1421 = vmatprep.mubr.f32.mxu0 0.0
        %1422 = vmatmul.mubr.f32.gmra.mrb[0].mxu0 %v1072
        %v1423 = vpop.f32.mrb[0].mxu0
        %v1424 = vadd.f32 0.0, %v1423
        %v1425 = vpop.f32.mrb[0].mxu0
        %1426 = vmatprep.mubr.f32.mxu0 0.0
        %1427 = vmatmul.mubr.f32.gmra.mrb[0].mxu0 %v1075
        %v1428 = vpop.f32.mrb[0].mxu0
        %v1429 = vadd.f32 0.0, %v1428
        %v1430 = vpop.f32.mrb[0].mxu0
        %1431 = vmatprep.mubr.f32.mxu0 0.0
        %1432 = vmatmul.mubr.f32.gmra.mrb[0].mxu0 %v1078
        %v1433 = vpop.f32.mrb[0].mxu0
        %v1434 = vadd.f32 0.0, %v1433
        %v1435 = vpop.f32.mrb[0].mxu0
        %1436 = vmatprep.mubr.f32.mxu0 0.0
        %1437 = vmatmul.mubr.f32.gmra.mrb[0].mxu0 %v1081
        %v1438 = vpop.f32.mrb[0].mxu0
        %v1439 = vadd.f32 0.0, %v1438
        %v1440 = vpop.f32.mrb[0].mxu0
        %1441 = vmatprep.mubr.f32.mxu0 0.0
        %1442 = vmatmul.mubr.f32.gmra.mrb[0].mxu0 %v1084
        %v1443 = vpop.f32.mrb[0].mxu0
        %v1444 = vadd.f32 0.0, %v1443
        %v1445 = vpop.f32.mrb[0].mxu0
        %1446 = vmatprep.mubr.f32.mxu0 0.0
        %1447 = vmatmul.mubr.f32.gmra.mrb[0].mxu0 %v1087
        %v1448 = vpop.f32.mrb[0].mxu0
        %v1449 = vadd.f32 0.0, %v1448
        %v1450 = vpop.f32.mrb[0].mxu0
        %1451 = vmatprep.mubr.f32.mxu0 0.0
        %1452 = vmatmul.mubr.f32.gmra.mrb[0].mxu0 %v1090
        %v1453 = vpop.f32.mrb[0].mxu0
        %v1454 = vadd.f32 0.0, %v1453
        %v1455 = vpop.f32.mrb[0].mxu0
        %1456 = vmatprep.mubr.f32.mxu0 0.0
        %1457 = vmatmul.mubr.f32.gmra.mrb[0].mxu0 %v1093
        %v1458 = vpop.f32.mrb[0].mxu0
        %v1459 = vadd.f32 0.0, %v1458
        %v1460 = vpop.f32.mrb[0].mxu0
        %1461 = vmatprep.mubr.f32.mxu0 0.0
        %1462 = vmatmul.mubr.f32.gmra.mrb[0].mxu0 %v1096
        %v1463 = vpop.f32.mrb[0].mxu0
        %v1464 = vadd.f32 0.0, %v1463
        %v1465 = vpop.f32.mrb[0].mxu0
        %1466 = vmatprep.mubr.f32.mxu0 0.0
        %1467 = vmatmul.mubr.f32.gmra.mrb[0].mxu0 %v1099
        %v1468 = vpop.f32.mrb[0].mxu0
        %v1469 = vadd.f32 0.0, %v1468
        %v1470 = vpop.f32.mrb[0].mxu0
        %1471 = vmatprep.mubr.f32.mxu0 0.0
        %1472 = vmatmul.mubr.f32.gmra.mrb[0].mxu0 %v1102
        %v1473 = vpop.f32.mrb[0].mxu0
        %v1474 = vadd.f32 0.0, %v1473
        %v1475 = vpop.f32.mrb[0].mxu0
        %1476 = vmatprep.mubr.f32.mxu0 0.0
        %1477 = vmatmul.mubr.f32.gmra.mrb[0].mxu0 %v1105
        %v1478 = vpop.f32.mrb[0].mxu0
        %v1479 = vadd.f32 0.0, %v1478
        %v1480 = vpop.f32.mrb[0].mxu0
        %1481 = vmatprep.mubr.f32.mxu0 0.0
        %1482 = vmatmul.mubr.f32.gmra.mrb[0].mxu0 %v1108
        %v1483 = vpop.f32.mrb[0].mxu0
        %v1484 = vadd.f32 0.0, %v1483
        %v1485 = vpop.f32.mrb[0].mxu0
        %1486 = vmatprep.mubr.f32.mxu0 0.0
        %1487 = vmatmul.mubr.f32.gmra.mrb[0].mxu0 %v1111
        %v1488 = vpop.f32.mrb[0].mxu0
        %v1489 = vadd.f32 0.0, %v1488
        %v1490 = vpop.f32.mrb[0].mxu0
        %1491 = vmatprep.mubr.f32.mxu0 0.0
        %1492 = vmatmul.mubr.f32.gmra.mrb[0].mxu0 %v1114
        %v1493 = vpop.f32.mrb[0].mxu0
        %v1494 = vadd.f32 0.0, %v1493
        %v1495 = vpop.f32.mrb[0].mxu0
        %1496 = vmatprep.mubr.f32.mxu0 0.0
        %1497 = vmatmul.mubr.f32.gmra.mrb[0].mxu0 %v1117
        %v1498 = vpop.f32.mrb[0].mxu0
        %v1499 = vadd.f32 0.0, %v1498
        %v1500 = vpop.f32.mrb[0].mxu0
        %1501 = vmatprep.mubr.f32.mxu0 0.0
        %1502 = vmatmul.mubr.f32.gmra.mrb[0].mxu0 %v1120
        %v1503 = vpop.f32.mrb[0].mxu0
        %v1504 = vadd.f32 0.0, %v1503
        %v1505 = vpop.f32.mrb[0].mxu0
        %1506 = vmatprep.mubr.f32.mxu0 0.0
        %1507 = vmatmul.mubr.f32.gmra.mrb[0].mxu0 %v1123
        %v1508 = vpop.f32.mrb[0].mxu0
        %v1509 = vadd.f32 0.0, %v1508
        %v1510 = vpop.f32.mrb[0].mxu0
        %1511 = vmatprep.mubr.f32.mxu0 0.0
        %1512 = vmatmul.mubr.f32.gmra.mrb[0].mxu0 %v1126
        %v1513 = vpop.f32.mrb[0].mxu0
        %v1514 = vadd.f32 0.0, %v1513
        %v1515 = vpop.f32.mrb[0].mxu0
        %1516 = vmatprep.mubr.f32.mxu0 0.0
        %1517 = vmatmul.mubr.f32.gmra.mrb[0].mxu0 %v1129
        %v1518 = vpop.f32.mrb[0].mxu0
        %v1519 = vadd.f32 0.0, %v1518
        %v1520 = vpop.f32.mrb[0].mxu0
        %1521 = vmatprep.mubr.f32.mxu0 0.0
        %1522 = vmatmul.mubr.f32.gmra.mrb[0].mxu0 %v1132
        %v1523 = vpop.f32.mrb[0].mxu0
        %v1524 = vadd.f32 0.0, %v1523
        %v1525 = vpop.f32.mrb[0].mxu0
        %1526 = vmatprep.mubr.f32.mxu0 0.0
        %1527 = vmatmul.mubr.f32.gmra.mrb[0].mxu0 %v1135
        %v1528 = vpop.f32.mrb[0].mxu0
        %v1529 = vadd.f32 0.0, %v1528
        %v1530 = vpop.f32.mrb[0].mxu0
        %1531 = vmatprep.mubr.f32.mxu0 0.0
        %1532 = vmatmul.mubr.f32.gmra.mrb[0].mxu0 %v1138
        %v1533 = vpop.f32.mrb[0].mxu0
        %v1534 = vadd.f32 0.0, %v1533
        %v1535 = vpop.f32.mrb[0].mxu0
        %1536 = vmatprep.mubr.f32.mxu0 0.0
        %1537 = vmatmul.mubr.f32.gmra.mrb[0].mxu0 %v1141
        %v1538 = vpop.f32.mrb[0].mxu0
        %v1539 = vadd.f32 0.0, %v1538
        %v1540 = vpop.f32.mrb[0].mxu0
        %1541 = vmatprep.mubr.f32.mxu0 0.0
        %1542 = vmatmul.mubr.f32.gmra.mrb[0].mxu0 %v1144
        %v1543 = vpop.f32.mrb[0].mxu0
        %v1544 = vadd.f32 0.0, %v1543
        %v1545 = vpop.f32.mrb[0].mxu0
        %1546 = vmatprep.mubr.f32.mxu0 0.0
        %1547 = vmatmul.mubr.f32.gmra.mrb[0].mxu0 %v1147
        %v1548 = vpop.f32.mrb[0].mxu0
        %v1549 = vadd.f32 0.0, %v1548
        %v1550 = vpop.f32.mrb[0].mxu0
        %1551 = vmatprep.mubr.f32.mxu0 0.0
        %1552 = vmatmul.mubr.f32.gmra.mrb[0].mxu0 %v1150
        %v1553 = vpop.f32.mrb[0].mxu0
        %v1554 = vadd.f32 0.0, %v1553
        %v1555 = vpop.f32.mrb[0].mxu0
        %1556 = vmatprep.mubr.f32.mxu0 0.0
        %1557 = vmatmul.mubr.f32.gmra.mrb[0].mxu0 %v1153
        %v1558 = vpop.f32.mrb[0].mxu0
        %v1559 = vadd.f32 0.0, %v1558
        %v1560 = vpop.f32.mrb[0].mxu0
        %1561 = vmatprep.mubr.f32.mxu0 0.0
        %1562 = vmatmul.mubr.f32.gmra.mrb[0].mxu0 %v1156
        %v1563 = vpop.f32.mrb[0].mxu0
        %v1564 = vadd.f32 0.0, %v1563
        %v1565 = vpop.f32.mrb[0].mxu0
        %1566 = vmatprep.mubr.f32.mxu0 0.0
        %1567 = vmatmul.mubr.f32.gmra.mrb[0].mxu0 %v1159
        %v1568 = vpop.f32.mrb[0].mxu0
        %v1569 = vadd.f32 0.0, %v1568
        %v1570 = vpop.f32.mrb[0].mxu0
        %1571 = vmatprep.mubr.f32.mxu0 0.0
        %1572 = vmatmul.mubr.f32.gmra.mrb[0].mxu0 %v1162
        %v1573 = vpop.f32.mrb[0].mxu0
        %v1574 = vadd.f32 0.0, %v1573
        %v1575 = vpop.f32.mrb[0].mxu0
        %1576 = vmatprep.mubr.f32.mxu0 0.0
        %1577 = vmatmul.mubr.f32.gmra.mrb[0].mxu0 %v1165
        %v1578 = vpop.f32.mrb[0].mxu0
        %v1579 = vadd.f32 0.0, %v1578
        %v1580 = vpop.f32.mrb[0].mxu0
        %1581 = vmatprep.mubr.f32.mxu0 0.0
        %1582 = vmatmul.mubr.f32.gmra.mrb[0].mxu0 %v1168
        %v1583 = vpop.f32.mrb[0].mxu0
        %v1584 = vadd.f32 0.0, %v1583
        %v1585 = vpop.f32.mrb[0].mxu0
        %1586 = vmatprep.mubr.f32.mxu0 0.0
        %1587 = vmatmul.mubr.f32.gmra.mrb[0].mxu0 %v1171
        %v1588 = vpop.f32.mrb[0].mxu0
        %v1589 = vadd.f32 0.0, %v1588
        %v1590 = vpop.f32.mrb[0].mxu0
        %1591 = vmatprep.mubr.f32.mxu0 0.0
        %1592 = vmatmul.mubr.f32.gmra.mrb[0].mxu0 %v1174
        %v1593 = vpop.f32.mrb[0].mxu0
        %v1594 = vadd.f32 0.0, %v1593
        %v1595 = vpop.f32.mrb[0].mxu0
        %1596 = vmatprep.mubr.f32.mxu0 0.0
        %1597 = vmatmul.mubr.f32.gmra.mrb[0].mxu0 %v1177
        %v1598 = vpop.f32.mrb[0].mxu0
        %v1599 = vadd.f32 0.0, %v1598
        %v1600 = vpop.f32.mrb[0].mxu0
        %1601 = vmatprep.mubr.f32.mxu0 0.0
        %1602 = vmatmul.mubr.f32.gmra.mrb[0].mxu0 %v1180
        %v1603 = vpop.f32.mrb[0].mxu0
        %v1604 = vadd.f32 0.0, %v1603
        %v1605 = vpop.f32.mrb[0].mxu0
        %1606 = vmatprep.mubr.f32.mxu0 0.0
        %1607 = vmatmul.mubr.f32.gmra.mrb[0].mxu0 %v1183
        %v1608 = vpop.f32.mrb[0].mxu0
        %v1609 = vadd.f32 0.0, %v1608
        %v1610 = vpop.f32.mrb[0].mxu0
        %1611 = vmatprep.mubr.f32.mxu0 0.0
        %1612 = vmatmul.mubr.f32.gmra.mrb[0].mxu0 %v1186
        %v1613 = vpop.f32.mrb[0].mxu0
        %v1614 = vadd.f32 0.0, %v1613
        %v1615 = vpop.f32.mrb[0].mxu0
        %1616 = vmatprep.mubr.f32.mxu0 0.0
        %1617 = vmatmul.mubr.f32.gmra.mrb[0].mxu0 %v1189
        %v1618 = vpop.f32.mrb[0].mxu0
        %v1619 = vadd.f32 0.0, %v1618
        %v1620 = vpop.f32.mrb[0].mxu0
        %1621 = vmatprep.mubr.f32.mxu0 0.0
        %1622 = vmatmul.mubr.f32.gmra.mrb[0].mxu0 %v1192
        %v1623 = vpop.f32.mrb[0].mxu0
        %v1624 = vadd.f32 0.0, %v1623
        %v1625 = vpop.f32.mrb[0].mxu0
        %1626 = vdwg.mxu0
        %v1627 = vmul.f32 %v1309, 1.442695
        %v1628 = vpow.pop %v1627
        %v1629 = vmul.f32 %v1314, 1.442695
        %v1630 = vpow.pop %v1629
        %v1631 = vmul.f32 %v1319, 1.442695
        %v1632 = vpow.pop %v1631
        %v1633 = vmul.f32 %v1324, 1.442695
        %v1634 = vpow.pop %v1633
        %v1635 = vmul.f32 %v1329, 1.442695
        %v1636 = vpow.pop %v1635
        %v1637 = vmul.f32 %v1334, 1.442695
        %v1638 = vpow.pop %v1637
        %v1639 = vmul.f32 %v1339, 1.442695
        %v1640 = vpow.pop %v1639
        %v1641 = vmul.f32 %v1344, 1.442695
        %v1642 = vpow.pop %v1641
        %v1643 = vmul.f32 %v1349, 1.442695
        %v1644 = vpow.pop %v1643
        %v1645 = vmul.f32 %v1354, 1.442695
        %v1646 = vpow.pop %v1645
        %v1647 = vmul.f32 %v1359, 1.442695
        %v1648 = vpow.pop %v1647
        %v1649 = vmul.f32 %v1364, 1.442695
        %v1650 = vpow.pop %v1649
        %v1651 = vmul.f32 %v1369, 1.442695
        %v1652 = vpow.pop %v1651
        %v1653 = vmul.f32 %v1374, 1.442695
        %v1654 = vpow.pop %v1653
        %v1655 = vmul.f32 %v1379, 1.442695
        %v1656 = vpow.pop %v1655
        %v1657 = vmul.f32 %v1384, 1.442695
        %v1658 = vpow.pop %v1657
        %v1659 = vmul.f32 %v1389, 1.442695
        %v1660 = vpow.pop %v1659
        %v1661 = vmul.f32 %v1394, 1.442695
        %v1662 = vpow.pop %v1661
        %v1663 = vmul.f32 %v1399, 1.442695
        %v1664 = vpow.pop %v1663
        %v1665 = vmul.f32 %v1404, 1.442695
        %v1666 = vpow.pop %v1665
        %v1667 = vmul.f32 %v1409, 1.442695
        %v1668 = vpow.pop %v1667
        %v1669 = vmul.f32 %v1414, 1.442695
        %v1670 = vpow.pop %v1669
        %v1671 = vmul.f32 %v1419, 1.442695
        %v1672 = vpow.pop %v1671
        %v1673 = vmul.f32 %v1424, 1.442695
        %v1674 = vpow.pop %v1673
        %v1675 = vmul.f32 %v1429, 1.442695
        %v1676 = vpow.pop %v1675
        %v1677 = vmul.f32 %v1434, 1.442695
        %v1678 = vpow.pop %v1677
        %v1679 = vmul.f32 %v1439, 1.442695
        %v1680 = vpow.pop %v1679
        %v1681 = vmul.f32 %v1444, 1.442695
        %v1682 = vpow.pop %v1681
        %v1683 = vmul.f32 %v1449, 1.442695
        %v1684 = vpow.pop %v1683
        %v1685 = vmul.f32 %v1454, 1.442695
        %v1686 = vpow.pop %v1685
        %v1687 = vmul.f32 %v1459, 1.442695
        %v1688 = vpow.pop %v1687
        %v1689 = vmul.f32 %v1464, 1.442695
        %v1690 = vpow.pop %v1689
        %v1691 = vmul.f32 %v1469, 1.442695
        %v1692 = vpow.pop %v1691
        %v1693 = vmul.f32 %v1474, 1.442695
        %v1694 = vpow.pop %v1693
        %v1695 = vmul.f32 %v1479, 1.442695
        %v1696 = vpow.pop %v1695
        %v1697 = vmul.f32 %v1484, 1.442695
        %v1698 = vpow.pop %v1697
        %v1699 = vmul.f32 %v1489, 1.442695
        %v1700 = vpow.pop %v1699
        %v1701 = vmul.f32 %v1494, 1.442695
        %v1702 = vpow.pop %v1701
        %v1703 = vmul.f32 %v1499, 1.442695
        %v1704 = vpow.pop %v1703
        %v1705 = vmul.f32 %v1504, 1.442695
        %v1706 = vpow.pop %v1705
        %v1707 = vmul.f32 %v1509, 1.442695
        %v1708 = vpow.pop %v1707
        %v1709 = vmul.f32 %v1514, 1.442695
        %v1710 = vpow.pop %v1709
        %v1711 = vmul.f32 %v1519, 1.442695
        %v1712 = vpow.pop %v1711
        %v1713 = vmul.f32 %v1524, 1.442695
        %v1714 = vpow.pop %v1713
        %v1715 = vmul.f32 %v1529, 1.442695
        %v1716 = vpow.pop %v1715
        %v1717 = vmul.f32 %v1534, 1.442695
        %v1718 = vpow.pop %v1717
        %v1719 = vmul.f32 %v1539, 1.442695
        %v1720 = vpow.pop %v1719
        %v1721 = vmul.f32 %v1544, 1.442695
        %v1722 = vpow.pop %v1721
        %v1723 = vmul.f32 %v1549, 1.442695
        %v1724 = vpow.pop %v1723
        %v1725 = vmul.f32 %v1554, 1.442695
        %v1726 = vpow.pop %v1725
        %v1727 = vmul.f32 %v1559, 1.442695
        %v1728 = vpow.pop %v1727
        %v1729 = vmul.f32 %v1564, 1.442695
        %v1730 = vpow.pop %v1729
        %v1731 = vmul.f32 %v1569, 1.442695
        %v1732 = vpow.pop %v1731
        %v1733 = vmul.f32 %v1574, 1.442695
        %v1734 = vpow.pop %v1733
        %v1735 = vmul.f32 %v1579, 1.442695
        %v1736 = vpow.pop %v1735
        %v1737 = vmul.f32 %v1584, 1.442695
        %v1738 = vpow.pop %v1737
        %v1739 = vmul.f32 %v1589, 1.442695
        %v1740 = vpow.pop %v1739
        %v1741 = vmul.f32 %v1594, 1.442695
        %v1742 = vpow.pop %v1741
        %v1743 = vmul.f32 %v1599, 1.442695
        %v1744 = vpow.pop %v1743
        %v1745 = vmul.f32 %v1604, 1.442695
        %v1746 = vpow.pop %v1745
        %v1747 = vmul.f32 %v1609, 1.442695
        %v1748 = vpow.pop %v1747
        %v1749 = vmul.f32 %v1614, 1.442695
        %v1750 = vpow.pop %v1749
        %v1751 = vmul.f32 %v1619, 1.442695
        %v1752 = vpow.pop %v1751
        %v1753 = vmul.f32 %v1624, 1.442695
        %v1754 = vpow.pop %v1753
        %1755 = vadd.xlane.f32.xlu0 %v1628
        %v1756 = vpop.xlane.xlu0 %1755
        %1757 = vadd.xlane.f32.xlu0 %v1630
        %v1758 = vpop.xlane.xlu0 %1757
        %1759 = vadd.xlane.f32.xlu0 %v1632
        %v1760 = vpop.xlane.xlu0 %1759
        %1761 = vadd.xlane.f32.xlu0 %v1634
        %v1762 = vpop.xlane.xlu0 %1761
        %1763 = vadd.xlane.f32.xlu0 %v1636
        %v1764 = vpop.xlane.xlu0 %1763
        %1765 = vadd.xlane.f32.xlu0 %v1638
        %v1766 = vpop.xlane.xlu0 %1765
        %1767 = vadd.xlane.f32.xlu0 %v1640
        %v1768 = vpop.xlane.xlu0 %1767
        %1769 = vadd.xlane.f32.xlu0 %v1642
        %v1770 = vpop.xlane.xlu0 %1769
        %1771 = vadd.xlane.f32.xlu0 %v1644
        %v1772 = vpop.xlane.xlu0 %1771
        %1773 = vadd.xlane.f32.xlu0 %v1646
        %v1774 = vpop.xlane.xlu0 %1773
        %1775 = vadd.xlane.f32.xlu0 %v1648
        %v1776 = vpop.xlane.xlu0 %1775
        %1777 = vadd.xlane.f32.xlu0 %v1650
        %v1778 = vpop.xlane.xlu0 %1777
        %1779 = vadd.xlane.f32.xlu0 %v1652
        %v1780 = vpop.xlane.xlu0 %1779
        %1781 = vadd.xlane.f32.xlu0 %v1654
        %v1782 = vpop.xlane.xlu0 %1781
        %1783 = vadd.xlane.f32.xlu0 %v1656
        %v1784 = vpop.xlane.xlu0 %1783
        %1785 = vadd.xlane.f32.xlu0 %v1658
        %v1786 = vpop.xlane.xlu0 %1785
        %1787 = vadd.xlane.f32.xlu0 %v1660
        %v1788 = vpop.xlane.xlu0 %1787
        %1789 = vadd.xlane.f32.xlu0 %v1662
        %v1790 = vpop.xlane.xlu0 %1789
        %1791 = vadd.xlane.f32.xlu0 %v1664
        %v1792 = vpop.xlane.xlu0 %1791
        %1793 = vadd.xlane.f32.xlu0 %v1666
        %v1794 = vpop.xlane.xlu0 %1793
        %1795 = vadd.xlane.f32.xlu0 %v1668
        %v1796 = vpop.xlane.xlu0 %1795
        %1797 = vadd.xlane.f32.xlu0 %v1670
        %v1798 = vpop.xlane.xlu0 %1797
        %1799 = vadd.xlane.f32.xlu0 %v1672
        %v1800 = vpop.xlane.xlu0 %1799
        %1801 = vadd.xlane.f32.xlu0 %v1674
        %v1802 = vpop.xlane.xlu0 %1801
        %1803 = vadd.xlane.f32.xlu0 %v1676
        %v1804 = vpop.xlane.xlu0 %1803
        %1805 = vadd.xlane.f32.xlu0 %v1678
        %v1806 = vpop.xlane.xlu0 %1805
        %1807 = vadd.xlane.f32.xlu0 %v1680
        %v1808 = vpop.xlane.xlu0 %1807
        %1809 = vadd.xlane.f32.xlu0 %v1682
        %v1810 = vpop.xlane.xlu0 %1809
        %1811 = vadd.xlane.f32.xlu0 %v1684
        %v1812 = vpop.xlane.xlu0 %1811
        %1813 = vadd.xlane.f32.xlu0 %v1686
        %v1814 = vpop.xlane.xlu0 %1813
        %1815 = vadd.xlane.f32.xlu0 %v1688
        %v1816 = vpop.xlane.xlu0 %1815
        %1817 = vadd.xlane.f32.xlu0 %v1690
        %v1818 = vpop.xlane.xlu0 %1817
        %1819 = vadd.xlane.f32.xlu0 %v1692
        %v1820 = vpop.xlane.xlu0 %1819
        %1821 = vadd.xlane.f32.xlu0 %v1694
        %v1822 = vpop.xlane.xlu0 %1821
        %1823 = vadd.xlane.f32.xlu0 %v1696
        %v1824 = vpop.xlane.xlu0 %1823
        %1825 = vadd.xlane.f32.xlu0 %v1698
        %v1826 = vpop.xlane.xlu0 %1825
        %1827 = vadd.xlane.f32.xlu0 %v1700
        %v1828 = vpop.xlane.xlu0 %1827
        %1829 = vadd.xlane.f32.xlu0 %v1702
        %v1830 = vpop.xlane.xlu0 %1829
        %1831 = vadd.xlane.f32.xlu0 %v1704
        %v1832 = vpop.xlane.xlu0 %1831
        %1833 = vadd.xlane.f32.xlu0 %v1706
        %v1834 = vpop.xlane.xlu0 %1833
        %1835 = vadd.xlane.f32.xlu0 %v1708
        %v1836 = vpop.xlane.xlu0 %1835
        %1837 = vadd.xlane.f32.xlu0 %v1710
        %v1838 = vpop.xlane.xlu0 %1837
        %1839 = vadd.xlane.f32.xlu0 %v1712
        %v1840 = vpop.xlane.xlu0 %1839
        %1841 = vadd.xlane.f32.xlu0 %v1714
        %v1842 = vpop.xlane.xlu0 %1841
        %1843 = vadd.xlane.f32.xlu0 %v1716
        %v1844 = vpop.xlane.xlu0 %1843
        %1845 = vadd.xlane.f32.xlu0 %v1718
        %v1846 = vpop.xlane.xlu0 %1845
        %1847 = vadd.xlane.f32.xlu0 %v1720
        %v1848 = vpop.xlane.xlu0 %1847
        %1849 = vadd.xlane.f32.xlu0 %v1722
        %v1850 = vpop.xlane.xlu0 %1849
        %1851 = vadd.xlane.f32.xlu0 %v1724
        %v1852 = vpop.xlane.xlu0 %1851
        %1853 = vadd.xlane.f32.xlu0 %v1726
        %v1854 = vpop.xlane.xlu0 %1853
        %1855 = vadd.xlane.f32.xlu0 %v1728
        %v1856 = vpop.xlane.xlu0 %1855
        %1857 = vadd.xlane.f32.xlu0 %v1730
        %v1858 = vpop.xlane.xlu0 %1857
        %1859 = vadd.xlane.f32.xlu0 %v1732
        %v1860 = vpop.xlane.xlu0 %1859
        %1861 = vadd.xlane.f32.xlu0 %v1734
        %v1862 = vpop.xlane.xlu0 %1861
        %1863 = vadd.xlane.f32.xlu0 %v1736
        %v1864 = vpop.xlane.xlu0 %1863
        %1865 = vadd.xlane.f32.xlu0 %v1738
        %v1866 = vpop.xlane.xlu0 %1865
        %1867 = vadd.xlane.f32.xlu0 %v1740
        %v1868 = vpop.xlane.xlu0 %1867
        %1869 = vadd.xlane.f32.xlu0 %v1742
        %v1870 = vpop.xlane.xlu0 %1869
        %1871 = vadd.xlane.f32.xlu0 %v1744
        %v1872 = vpop.xlane.xlu0 %1871
        %1873 = vadd.xlane.f32.xlu0 %v1746
        %v1874 = vpop.xlane.xlu0 %1873
        %1875 = vadd.xlane.f32.xlu0 %v1748
        %v1876 = vpop.xlane.xlu0 %1875
        %1877 = vadd.xlane.f32.xlu0 %v1750
        %v1878 = vpop.xlane.xlu0 %1877
        %1879 = vadd.xlane.f32.xlu0 %v1752
        %v1880 = vpop.xlane.xlu0 %1879
        %1881 = vadd.xlane.f32.xlu0 %v1754
        %v1882 = vpop.xlane.xlu0 %1881
        %v1883 = vld [vmem:[%s291] sm:$0xff]
        %v1884 = vld [vmem:[%s291 + $0x8] sm:$0xff]
        %v1885 = vld [vmem:[%s291 + $0x10] sm:$0xff]
        %v1886 = vld [vmem:[%s291 + $0x18] sm:$0xff]
        %v1887 = vld [vmem:[%s291 + $0x20] sm:$0xff]
        %v1888 = vld [vmem:[%s291 + $0x28] sm:$0xff]
        %v1889 = vld [vmem:[%s291 + $0x30] sm:$0xff]
        %v1890 = vld [vmem:[%s291 + $0x38] sm:$0xff]
        %v1891 = vld [vmem:[%s291 + $0x40] sm:$0xff]
        %v1892 = vld [vmem:[%s291 + $0x48] sm:$0xff]
        %v1893 = vld [vmem:[%s291 + $0x50] sm:$0xff]
        %v1894 = vld [vmem:[%s291 + $0x58] sm:$0xff]
        %v1895 = vld [vmem:[%s291 + $0x60] sm:$0xff]
        %v1896 = vld [vmem:[%s291 + $0x68] sm:$0xff]
        %v1897 = vld [vmem:[%s291 + $0x70] sm:$0xff]
        %v1898 = vld [vmem:[%s291 + $0x78] sm:$0xff]
        %v1899 = vld [vmem:[%s291 + $0x80] sm:$0xff]
        %v1900 = vld [vmem:[%s291 + $0x88] sm:$0xff]
        %v1901 = vld [vmem:[%s291 + $0x90] sm:$0xff]
        %v1902 = vld [vmem:[%s291 + $0x98] sm:$0xff]
        %v1903 = vld [vmem:[%s291 + $0xa0] sm:$0xff]
        %v1904 = vld [vmem:[%s291 + $0xa8] sm:$0xff]
        %v1905 = vld [vmem:[%s291 + $0xb0] sm:$0xff]
        %v1906 = vld [vmem:[%s291 + $0xb8] sm:$0xff]
        %v1907 = vld [vmem:[%s291 + $0xc0] sm:$0xff]
        %v1908 = vld [vmem:[%s291 + $0xc8] sm:$0xff]
        %v1909 = vld [vmem:[%s291 + $0xd0] sm:$0xff]
        %v1910 = vld [vmem:[%s291 + $0xd8] sm:$0xff]
        %v1911 = vld [vmem:[%s291 + $0xe0] sm:$0xff]
        %v1912 = vld [vmem:[%s291 + $0xe8] sm:$0xff]
        %v1913 = vld [vmem:[%s291 + $0xf0] sm:$0xff]
        %v1914 = vld [vmem:[%s291 + $0xf8] sm:$0xff]
        %v1915 = vld [vmem:[%s291 + $0x100] sm:$0xff]
        %v1916 = vld [vmem:[%s291 + $0x108] sm:$0xff]
        %v1917 = vld [vmem:[%s291 + $0x110] sm:$0xff]
        %v1918 = vld [vmem:[%s291 + $0x118] sm:$0xff]
        %v1919 = vld [vmem:[%s291 + $0x120] sm:$0xff]
        %v1920 = vld [vmem:[%s291 + $0x128] sm:$0xff]
        %v1921 = vld [vmem:[%s291 + $0x130] sm:$0xff]
        %v1922 = vld [vmem:[%s291 + $0x138] sm:$0xff]
        %v1923 = vld [vmem:[%s291 + $0x140] sm:$0xff]
        %v1924 = vld [vmem:[%s291 + $0x148] sm:$0xff]
        %v1925 = vld [vmem:[%s291 + $0x150] sm:$0xff]
        %v1926 = vld [vmem:[%s291 + $0x158] sm:$0xff]
        %v1927 = vld [vmem:[%s291 + $0x160] sm:$0xff]
        %v1928 = vld [vmem:[%s291 + $0x168] sm:$0xff]
        %v1929 = vld [vmem:[%s291 + $0x170] sm:$0xff]
        %v1930 = vld [vmem:[%s291 + $0x178] sm:$0xff]
        %v1931 = vld [vmem:[%s291 + $0x180] sm:$0xff]
        %v1932 = vld [vmem:[%s291 + $0x188] sm:$0xff]
        %v1933 = vld [vmem:[%s291 + $0x190] sm:$0xff]
        %v1934 = vld [vmem:[%s291 + $0x198] sm:$0xff]
        %v1935 = vld [vmem:[%s291 + $0x1a0] sm:$0xff]
        %v1936 = vld [vmem:[%s291 + $0x1a8] sm:$0xff]
        %v1937 = vld [vmem:[%s291 + $0x1b0] sm:$0xff]
        %v1938 = vld [vmem:[%s291 + $0x1b8] sm:$0xff]
        %v1939 = vld [vmem:[%s291 + $0x1c0] sm:$0xff]
        %v1940 = vld [vmem:[%s291 + $0x1c8] sm:$0xff]
        %v1941 = vld [vmem:[%s291 + $0x1d0] sm:$0xff]
        %v1942 = vld [vmem:[%s291 + $0x1d8] sm:$0xff]
        %v1943 = vld [vmem:[%s291 + $0x1e0] sm:$0xff]
        %v1944 = vld [vmem:[%s291 + $0x1e8] sm:$0xff]
        %v1945 = vld [vmem:[%s291 + $0x1f0] sm:$0xff]
        %v1946 = vld [vmem:[%s291 + $0x1f8] sm:$0xff]
        %v1947 = vrcp.pop %v1756
        %v1948 = vrcp.pop %v1758
        %v1949 = vrcp.pop %v1760
        %v1950 = vrcp.pop %v1762
        %v1951 = vrcp.pop %v1764
        %v1952 = vrcp.pop %v1766
        %v1953 = vrcp.pop %v1768
        %v1954 = vrcp.pop %v1770
        %v1955 = vrcp.pop %v1772
        %v1956 = vrcp.pop %v1774
        %v1957 = vrcp.pop %v1776
        %v1958 = vrcp.pop %v1778
        %v1959 = vrcp.pop %v1780
        %v1960 = vrcp.pop %v1782
        %v1961 = vrcp.pop %v1784
        %v1962 = vrcp.pop %v1786
        %v1963 = vrcp.pop %v1788
        %v1964 = vrcp.pop %v1790
        %v1965 = vrcp.pop %v1792
        %v1966 = vrcp.pop %v1794
        %v1967 = vrcp.pop %v1796
        %v1968 = vrcp.pop %v1798
        %v1969 = vrcp.pop %v1800
        %v1970 = vrcp.pop %v1802
        %v1971 = vrcp.pop %v1804
        %v1972 = vrcp.pop %v1806
        %v1973 = vrcp.pop %v1808
        %v1974 = vrcp.pop %v1810
        %v1975 = vrcp.pop %v1812
        %v1976 = vrcp.pop %v1814
        %v1977 = vrcp.pop %v1816
        %v1978 = vrcp.pop %v1818
        %v1979 = vrcp.pop %v1820
        %v1980 = vrcp.pop %v1822
        %v1981 = vrcp.pop %v1824
        %v1982 = vrcp.pop %v1826
        %v1983 = vrcp.pop %v1828
        %v1984 = vrcp.pop %v1830
        %v1985 = vrcp.pop %v1832
        %v1986 = vrcp.pop %v1834
        %v1987 = vrcp.pop %v1836
        %v1988 = vrcp.pop %v1838
        %v1989 = vrcp.pop %v1840
        %v1990 = vrcp.pop %v1842
        %v1991 = vrcp.pop %v1844
        %v1992 = vrcp.pop %v1846
        %v1993 = vrcp.pop %v1848
        %v1994 = vrcp.pop %v1850
        %v1995 = vrcp.pop %v1852
        %v1996 = vrcp.pop %v1854
        %v1997 = vrcp.pop %v1856
        %v1998 = vrcp.pop %v1858
        %v1999 = vrcp.pop %v1860
        %v2000 = vrcp.pop %v1862
        %v2001 = vrcp.pop %v1864
        %v2002 = vrcp.pop %v1866
        %v2003 = vrcp.pop %v1868
        %v2004 = vrcp.pop %v1870
        %v2005 = vrcp.pop %v1872
        %v2006 = vrcp.pop %v1874
        %v2007 = vrcp.pop %v1876
        %v2008 = vrcp.pop %v1878
        %v2009 = vrcp.pop %v1880
        %v2010 = vrcp.pop %v1882
        %v2011 = vmul.f32 %v1947, %v1883
        %v2012 = vmul.f32 %v1948, %v1884
        %v2013 = vmul.f32 %v1949, %v1885
        %v2014 = vmul.f32 %v1950, %v1886
        %v2015 = vmul.f32 %v1951, %v1887
        %v2016 = vmul.f32 %v1952, %v1888
        %v2017 = vmul.f32 %v1953, %v1889
        %v2018 = vmul.f32 %v1954, %v1890
        %v2019 = vmul.f32 %v1955, %v1891
        %v2020 = vmul.f32 %v1956, %v1892
        %v2021 = vmul.f32 %v1957, %v1893
        %v2022 = vmul.f32 %v1958, %v1894
        %v2023 = vmul.f32 %v1959, %v1895
        %v2024 = vmul.f32 %v1960, %v1896
        %v2025 = vmul.f32 %v1961, %v1897
        %v2026 = vmul.f32 %v1962, %v1898
        %v2027 = vmul.f32 %v1963, %v1899
        %v2028 = vmul.f32 %v1964, %v1900
        %v2029 = vmul.f32 %v1965, %v1901
        %v2030 = vmul.f32 %v1966, %v1902
        %v2031 = vmul.f32 %v1967, %v1903
        %v2032 = vmul.f32 %v1968, %v1904
        %v2033 = vmul.f32 %v1969, %v1905
        %v2034 = vmul.f32 %v1970, %v1906
        %v2035 = vmul.f32 %v1971, %v1907
        %v2036 = vmul.f32 %v1972, %v1908
        %v2037 = vmul.f32 %v1973, %v1909
        %v2038 = vmul.f32 %v1974, %v1910
        %v2039 = vmul.f32 %v1975, %v1911
        %v2040 = vmul.f32 %v1976, %v1912
        %v2041 = vmul.f32 %v1977, %v1913
        %v2042 = vmul.f32 %v1978, %v1914
        %v2043 = vmul.f32 %v1979, %v1915
        %v2044 = vmul.f32 %v1980, %v1916
        %v2045 = vmul.f32 %v1981, %v1917
        %v2046 = vmul.f32 %v1982, %v1918
        %v2047 = vmul.f32 %v1983, %v1919
        %v2048 = vmul.f32 %v1984, %v1920
        %v2049 = vmul.f32 %v1985, %v1921
        %v2050 = vmul.f32 %v1986, %v1922
        %v2051 = vmul.f32 %v1987, %v1923
        %v2052 = vmul.f32 %v1988, %v1924
        %v2053 = vmul.f32 %v1989, %v1925
        %v2054 = vmul.f32 %v1990, %v1926
        %v2055 = vmul.f32 %v1991, %v1927
        %v2056 = vmul.f32 %v1992, %v1928
        %v2057 = vmul.f32 %v1993, %v1929
        %v2058 = vmul.f32 %v1994, %v1930
        %v2059 = vmul.f32 %v1995, %v1931
        %v2060 = vmul.f32 %v1996, %v1932
        %v2061 = vmul.f32 %v1997, %v1933
        %v2062 = vmul.f32 %v1998, %v1934
        %v2063 = vmul.f32 %v1999, %v1935
        %v2064 = vmul.f32 %v2000, %v1936
        %v2065 = vmul.f32 %v2001, %v1937
        %v2066 = vmul.f32 %v2002, %v1938
        %v2067 = vmul.f32 %v2003, %v1939
        %v2068 = vmul.f32 %v2004, %v1940
        %v2069 = vmul.f32 %v2005, %v1941
        %v2070 = vmul.f32 %v2006, %v1942
        %v2071 = vmul.f32 %v2007, %v1943
        %v2072 = vmul.f32 %v2008, %v1944
        %v2073 = vmul.f32 %v2009, %v1945
        %v2074 = vmul.f32 %v2010, %v1946
        %v2075 = vld [vmem:[%s295] sm:$0x1]
        %2077 = vset.pattern.permute.xlu0 0
        %2078 = vperm.xlu0 %2077, %v2011
        %v2079 = vpop.permute.xlu0 %2078
        %2082 = vset.pattern.permute.xlu0 0
        %2083 = vperm.xlu0 %2082, %v2012
        %v2084 = vpop.permute.xlu0 %2083
        %2087 = vset.pattern.permute.xlu0 0
        %2088 = vperm.xlu0 %2087, %v2013
        %v2089 = vpop.permute.xlu0 %2088
        %2092 = vset.pattern.permute.xlu0 0
        %2093 = vperm.xlu0 %2092, %v2014
        %v2094 = vpop.permute.xlu0 %2093
        %2097 = vset.pattern.permute.xlu0 0
        %2098 = vperm.xlu0 %2097, %v2015
        %v2099 = vpop.permute.xlu0 %2098
        %2102 = vset.pattern.permute.xlu0 0
        %2103 = vperm.xlu0 %2102, %v2016
        %v2104 = vpop.permute.xlu0 %2103
        %2107 = vset.pattern.permute.xlu0 0
        %2108 = vperm.xlu0 %2107, %v2017
        %v2109 = vpop.permute.xlu0 %2108
        %2112 = vset.pattern.permute.xlu0 0
        %2113 = vperm.xlu0 %2112, %v2018
        %v2114 = vpop.permute.xlu0 %2113
        %2117 = vset.pattern.permute.xlu0 0
        %2118 = vperm.xlu0 %2117, %v2019
        %v2119 = vpop.permute.xlu0 %2118
        %2122 = vset.pattern.permute.xlu0 0
        %2123 = vperm.xlu0 %2122, %v2020
        %v2124 = vpop.permute.xlu0 %2123
        %2127 = vset.pattern.permute.xlu0 0
        %2128 = vperm.xlu0 %2127, %v2021
        %v2129 = vpop.permute.xlu0 %2128
        %2132 = vset.pattern.permute.xlu0 0
        %2133 = vperm.xlu0 %2132, %v2022
        %v2134 = vpop.permute.xlu0 %2133
        %2137 = vset.pattern.permute.xlu0 0
        %2138 = vperm.xlu0 %2137, %v2023
        %v2139 = vpop.permute.xlu0 %2138
        %2142 = vset.pattern.permute.xlu0 0
        %2143 = vperm.xlu0 %2142, %v2024
        %v2144 = vpop.permute.xlu0 %2143
        %2147 = vset.pattern.permute.xlu0 0
        %2148 = vperm.xlu0 %2147, %v2025
        %v2149 = vpop.permute.xlu0 %2148
        %2152 = vset.pattern.permute.xlu0 0
        %2153 = vperm.xlu0 %2152, %v2026
        %v2154 = vpop.permute.xlu0 %2153
        %2157 = vset.pattern.permute.xlu0 0
        %2158 = vperm.xlu0 %2157, %v2027
        %v2159 = vpop.permute.xlu0 %2158
        %2162 = vset.pattern.permute.xlu0 0
        %2163 = vperm.xlu0 %2162, %v2028
        %v2164 = vpop.permute.xlu0 %2163
        %2167 = vset.pattern.permute.xlu0 0
        %2168 = vperm.xlu0 %2167, %v2029
        %v2169 = vpop.permute.xlu0 %2168
        %2172 = vset.pattern.permute.xlu0 0
        %2173 = vperm.xlu0 %2172, %v2030
        %v2174 = vpop.permute.xlu0 %2173
        %2177 = vset.pattern.permute.xlu0 0
        %2178 = vperm.xlu0 %2177, %v2031
        %v2179 = vpop.permute.xlu0 %2178
        %2182 = vset.pattern.permute.xlu0 0
        %2183 = vperm.xlu0 %2182, %v2032
        %v2184 = vpop.permute.xlu0 %2183
        %2187 = vset.pattern.permute.xlu0 0
        %2188 = vperm.xlu0 %2187, %v2033
        %v2189 = vpop.permute.xlu0 %2188
        %2192 = vset.pattern.permute.xlu0 0
        %2193 = vperm.xlu0 %2192, %v2034
        %v2194 = vpop.permute.xlu0 %2193
        %2197 = vset.pattern.permute.xlu0 0
        %2198 = vperm.xlu0 %2197, %v2035
        %v2199 = vpop.permute.xlu0 %2198
        %2202 = vset.pattern.permute.xlu0 0
        %2203 = vperm.xlu0 %2202, %v2036
        %v2204 = vpop.permute.xlu0 %2203
        %2207 = vset.pattern.permute.xlu0 0
        %2208 = vperm.xlu0 %2207, %v2037
        %v2209 = vpop.permute.xlu0 %2208
        %2212 = vset.pattern.permute.xlu0 0
        %2213 = vperm.xlu0 %2212, %v2038
        %v2214 = vpop.permute.xlu0 %2213
        %2217 = vset.pattern.permute.xlu0 0
        %2218 = vperm.xlu0 %2217, %v2039
        %v2219 = vpop.permute.xlu0 %2218
        %2222 = vset.pattern.permute.xlu0 0
        %2223 = vperm.xlu0 %2222, %v2040
        %v2224 = vpop.permute.xlu0 %2223
        %2227 = vset.pattern.permute.xlu0 0
        %2228 = vperm.xlu0 %2227, %v2041
        %v2229 = vpop.permute.xlu0 %2228
        %2232 = vset.pattern.permute.xlu0 0
        %2233 = vperm.xlu0 %2232, %v2042
        %v2234 = vpop.permute.xlu0 %2233
        %2237 = vset.pattern.permute.xlu0 0
        %2238 = vperm.xlu0 %2237, %v2043
        %v2239 = vpop.permute.xlu0 %2238
        %2242 = vset.pattern.permute.xlu0 0
        %2243 = vperm.xlu0 %2242, %v2044
        %v2244 = vpop.permute.xlu0 %2243
        %2247 = vset.pattern.permute.xlu0 0
        %2248 = vperm.xlu0 %2247, %v2045
        %v2249 = vpop.permute.xlu0 %2248
        %2252 = vset.pattern.permute.xlu0 0
        %2253 = vperm.xlu0 %2252, %v2046
        %v2254 = vpop.permute.xlu0 %2253
        %2257 = vset.pattern.permute.xlu0 0
        %2258 = vperm.xlu0 %2257, %v2047
        %v2259 = vpop.permute.xlu0 %2258
        %2262 = vset.pattern.permute.xlu0 0
        %2263 = vperm.xlu0 %2262, %v2048
        %v2264 = vpop.permute.xlu0 %2263
        %2267 = vset.pattern.permute.xlu0 0
        %2268 = vperm.xlu0 %2267, %v2049
        %v2269 = vpop.permute.xlu0 %2268
        %2272 = vset.pattern.permute.xlu0 0
        %2273 = vperm.xlu0 %2272, %v2050
        %v2274 = vpop.permute.xlu0 %2273
        %2277 = vset.pattern.permute.xlu0 0
        %2278 = vperm.xlu0 %2277, %v2051
        %v2279 = vpop.permute.xlu0 %2278
        %2282 = vset.pattern.permute.xlu0 0
        %2283 = vperm.xlu0 %2282, %v2052
        %v2284 = vpop.permute.xlu0 %2283
        %2287 = vset.pattern.permute.xlu0 0
        %2288 = vperm.xlu0 %2287, %v2053
        %v2289 = vpop.permute.xlu0 %2288
        %2292 = vset.pattern.permute.xlu0 0
        %2293 = vperm.xlu0 %2292, %v2054
        %v2294 = vpop.permute.xlu0 %2293
        %2297 = vset.pattern.permute.xlu0 0
        %2298 = vperm.xlu0 %2297, %v2055
        %v2299 = vpop.permute.xlu0 %2298
        %2302 = vset.pattern.permute.xlu0 0
        %2303 = vperm.xlu0 %2302, %v2056
        %v2304 = vpop.permute.xlu0 %2303
        %2307 = vset.pattern.permute.xlu0 0
        %2308 = vperm.xlu0 %2307, %v2057
        %v2309 = vpop.permute.xlu0 %2308
        %2312 = vset.pattern.permute.xlu0 0
        %2313 = vperm.xlu0 %2312, %v2058
        %v2314 = vpop.permute.xlu0 %2313
        %2317 = vset.pattern.permute.xlu0 0
        %2318 = vperm.xlu0 %2317, %v2059
        %v2319 = vpop.permute.xlu0 %2318
        %2322 = vset.pattern.permute.xlu0 0
        %2323 = vperm.xlu0 %2322, %v2060
        %v2324 = vpop.permute.xlu0 %2323
        %2327 = vset.pattern.permute.xlu0 0
        %2328 = vperm.xlu0 %2327, %v2061
        %v2329 = vpop.permute.xlu0 %2328
        %2332 = vset.pattern.permute.xlu0 0
        %2333 = vperm.xlu0 %2332, %v2062
        %v2334 = vpop.permute.xlu0 %2333
        %2337 = vset.pattern.permute.xlu0 0
        %2338 = vperm.xlu0 %2337, %v2063
        %v2339 = vpop.permute.xlu0 %2338
        %2342 = vset.pattern.permute.xlu0 0
        %2343 = vperm.xlu0 %2342, %v2064
        %v2344 = vpop.permute.xlu0 %2343
        %2347 = vset.pattern.permute.xlu0 0
        %2348 = vperm.xlu0 %2347, %v2065
        %v2349 = vpop.permute.xlu0 %2348
        %2352 = vset.pattern.permute.xlu0 0
        %2353 = vperm.xlu0 %2352, %v2066
        %v2354 = vpop.permute.xlu0 %2353
        %2357 = vset.pattern.permute.xlu0 0
        %2358 = vperm.xlu0 %2357, %v2067
        %v2359 = vpop.permute.xlu0 %2358
        %2362 = vset.pattern.permute.xlu0 0
        %2363 = vperm.xlu0 %2362, %v2068
        %v2364 = vpop.permute.xlu0 %2363
        %2367 = vset.pattern.permute.xlu0 0
        %2368 = vperm.xlu0 %2367, %v2069
        %v2369 = vpop.permute.xlu0 %2368
        %2372 = vset.pattern.permute.xlu0 0
        %2373 = vperm.xlu0 %2372, %v2070
        %v2374 = vpop.permute.xlu0 %2373
        %2377 = vset.pattern.permute.xlu0 0
        %2378 = vperm.xlu0 %2377, %v2071
        %v2379 = vpop.permute.xlu0 %2378
        %2382 = vset.pattern.permute.xlu0 0
        %2383 = vperm.xlu0 %2382, %v2072
        %v2384 = vpop.permute.xlu0 %2383
        %2387 = vset.pattern.permute.xlu0 0
        %2388 = vperm.xlu0 %2387, %v2073
        %v2389 = vpop.permute.xlu0 %2388
        %2392 = vset.pattern.permute.xlu0 0
        %2393 = vperm.xlu0 %2392, %v2074
        %v2394 = vpop.permute.xlu0 %2393
        %v2396 = vmul.f32 %v1628, %v2079
        %v2397 = vmul.f32 %v1630, %v2084
        %v2398 = vmul.f32 %v1632, %v2089
        %v2399 = vmul.f32 %v1634, %v2094
        %v2400 = vmul.f32 %v1636, %v2099
        %v2401 = vmul.f32 %v1638, %v2104
        %v2402 = vmul.f32 %v1640, %v2109
        %v2403 = vmul.f32 %v1642, %v2114
        %v2404 = vmul.f32 %v1644, %v2119
        %v2405 = vmul.f32 %v1646, %v2124
        %v2406 = vmul.f32 %v1648, %v2129
        %v2407 = vmul.f32 %v1650, %v2134
        %v2408 = vmul.f32 %v1652, %v2139
        %v2409 = vmul.f32 %v1654, %v2144
        %v2410 = vmul.f32 %v1656, %v2149
        %v2411 = vmul.f32 %v1658, %v2154
        %v2412 = vmul.f32 %v1660, %v2159
        %v2413 = vmul.f32 %v1662, %v2164
        %v2414 = vmul.f32 %v1664, %v2169
        %v2415 = vmul.f32 %v1666, %v2174
        %v2416 = vmul.f32 %v1668, %v2179
        %v2417 = vmul.f32 %v1670, %v2184
        %v2418 = vmul.f32 %v1672, %v2189
        %v2419 = vmul.f32 %v1674, %v2194
        %v2420 = vmul.f32 %v1676, %v2199
        %v2421 = vmul.f32 %v1678, %v2204
        %v2422 = vmul.f32 %v1680, %v2209
        %v2423 = vmul.f32 %v1682, %v2214
        %v2424 = vmul.f32 %v1684, %v2219
        %v2425 = vmul.f32 %v1686, %v2224
        %v2426 = vmul.f32 %v1688, %v2229
        %v2427 = vmul.f32 %v1690, %v2234
        %v2428 = vmul.f32 %v1692, %v2239
        %v2429 = vmul.f32 %v1694, %v2244
        %v2430 = vmul.f32 %v1696, %v2249
        %v2431 = vmul.f32 %v1698, %v2254
        %v2432 = vmul.f32 %v1700, %v2259
        %v2433 = vmul.f32 %v1702, %v2264
        %v2434 = vmul.f32 %v1704, %v2269
        %v2435 = vmul.f32 %v1706, %v2274
        %v2436 = vmul.f32 %v1708, %v2279
        %v2437 = vmul.f32 %v1710, %v2284
        %v2438 = vmul.f32 %v1712, %v2289
        %v2439 = vmul.f32 %v1714, %v2294
        %v2440 = vmul.f32 %v1716, %v2299
        %v2441 = vmul.f32 %v1718, %v2304
        %v2442 = vmul.f32 %v1720, %v2309
        %v2443 = vmul.f32 %v1722, %v2314
        %v2444 = vmul.f32 %v1724, %v2319
        %v2445 = vmul.f32 %v1726, %v2324
        %v2446 = vmul.f32 %v1728, %v2329
        %v2447 = vmul.f32 %v1730, %v2334
        %v2448 = vmul.f32 %v1732, %v2339
        %v2449 = vmul.f32 %v1734, %v2344
        %v2450 = vmul.f32 %v1736, %v2349
        %v2451 = vmul.f32 %v1738, %v2354
        %v2452 = vmul.f32 %v1740, %v2359
        %v2453 = vmul.f32 %v1742, %v2364
        %v2454 = vmul.f32 %v1744, %v2369
        %v2455 = vmul.f32 %v1746, %v2374
        %v2456 = vmul.f32 %v1748, %v2379
        %v2457 = vmul.f32 %v1750, %v2384
        %v2458 = vmul.f32 %v1752, %v2389
        %v2459 = vmul.f32 %v1754, %v2394
        %v2461 = vlaneseq
        %v2462 = vshrl.u32 %v2461, 7
        %v2463 = vsub.s32 0, %v2462
        %v2464 = vrot.slane %v2075, %v2463
        %v2466 = vmul.f32 %v2396, %v2464
        %v2467 = vmul.f32 %v2397, %v2464
        %v2468 = vmul.f32 %v2398, %v2464
        %v2469 = vmul.f32 %v2399, %v2464
        %v2470 = vmul.f32 %v2400, %v2464
        %v2471 = vmul.f32 %v2401, %v2464
        %v2472 = vmul.f32 %v2402, %v2464
        %v2473 = vmul.f32 %v2403, %v2464
        %v2474 = vmul.f32 %v2404, %v2464
        %v2475 = vmul.f32 %v2405, %v2464
        %v2476 = vmul.f32 %v2406, %v2464
        %v2477 = vmul.f32 %v2407, %v2464
        %v2478 = vmul.f32 %v2408, %v2464
        %v2479 = vmul.f32 %v2409, %v2464
        %v2480 = vmul.f32 %v2410, %v2464
        %v2481 = vmul.f32 %v2411, %v2464
        %v2482 = vmul.f32 %v2412, %v2464
        %v2483 = vmul.f32 %v2413, %v2464
        %v2484 = vmul.f32 %v2414, %v2464
        %v2485 = vmul.f32 %v2415, %v2464
        %v2486 = vmul.f32 %v2416, %v2464
        %v2487 = vmul.f32 %v2417, %v2464
        %v2488 = vmul.f32 %v2418, %v2464
        %v2489 = vmul.f32 %v2419, %v2464
        %v2490 = vmul.f32 %v2420, %v2464
        %v2491 = vmul.f32 %v2421, %v2464
        %v2492 = vmul.f32 %v2422, %v2464
        %v2493 = vmul.f32 %v2423, %v2464
        %v2494 = vmul.f32 %v2424, %v2464
        %v2495 = vmul.f32 %v2425, %v2464
        %v2496 = vmul.f32 %v2426, %v2464
        %v2497 = vmul.f32 %v2427, %v2464
        %v2498 = vmul.f32 %v2428, %v2464
        %v2499 = vmul.f32 %v2429, %v2464
        %v2500 = vmul.f32 %v2430, %v2464
        %v2501 = vmul.f32 %v2431, %v2464
        %v2502 = vmul.f32 %v2432, %v2464
        %v2503 = vmul.f32 %v2433, %v2464
        %v2504 = vmul.f32 %v2434, %v2464
        %v2505 = vmul.f32 %v2435, %v2464
        %v2506 = vmul.f32 %v2436, %v2464
        %v2507 = vmul.f32 %v2437, %v2464
        %v2508 = vmul.f32 %v2438, %v2464
        %v2509 = vmul.f32 %v2439, %v2464
        %v2510 = vmul.f32 %v2440, %v2464
        %v2511 = vmul.f32 %v2441, %v2464
        %v2512 = vmul.f32 %v2442, %v2464
        %v2513 = vmul.f32 %v2443, %v2464
        %v2514 = vmul.f32 %v2444, %v2464
        %v2515 = vmul.f32 %v2445, %v2464
        %v2516 = vmul.f32 %v2446, %v2464
        %v2517 = vmul.f32 %v2447, %v2464
        %v2518 = vmul.f32 %v2448, %v2464
        %v2519 = vmul.f32 %v2449, %v2464
        %v2520 = vmul.f32 %v2450, %v2464
        %v2521 = vmul.f32 %v2451, %v2464
        %v2522 = vmul.f32 %v2452, %v2464
        %v2523 = vmul.f32 %v2453, %v2464
        %v2524 = vmul.f32 %v2454, %v2464
        %v2525 = vmul.f32 %v2455, %v2464
        %v2526 = vmul.f32 %v2456, %v2464
        %v2527 = vmul.f32 %v2457, %v2464
        %v2528 = vmul.f32 %v2458, %v2464
        %v2529 = vmul.f32 %v2459, %v2464
        %2530 = vst [vmem:[%s267] sm:$0xff] %v2466
        %2531 = vst [vmem:[%s267 + $0x8] sm:$0xff] %v2467
        %2532 = vst [vmem:[%s267 + $0x10] sm:$0xff] %v2468
        %2533 = vst [vmem:[%s267 + $0x18] sm:$0xff] %v2469
        %2534 = vst [vmem:[%s267 + $0x20] sm:$0xff] %v2470
        %2535 = vst [vmem:[%s267 + $0x28] sm:$0xff] %v2471
        %2536 = vst [vmem:[%s267 + $0x30] sm:$0xff] %v2472
        %2537 = vst [vmem:[%s267 + $0x38] sm:$0xff] %v2473
        %2538 = vst [vmem:[%s267 + $0x40] sm:$0xff] %v2474
        %2539 = vst [vmem:[%s267 + $0x48] sm:$0xff] %v2475
        %2540 = vst [vmem:[%s267 + $0x50] sm:$0xff] %v2476
        %2541 = vst [vmem:[%s267 + $0x58] sm:$0xff] %v2477
        %2542 = vst [vmem:[%s267 + $0x60] sm:$0xff] %v2478
        %2543 = vst [vmem:[%s267 + $0x68] sm:$0xff] %v2479
        %2544 = vst [vmem:[%s267 + $0x70] sm:$0xff] %v2480
        %2545 = vst [vmem:[%s267 + $0x78] sm:$0xff] %v2481
        %2546 = vst [vmem:[%s267 + $0x80] sm:$0xff] %v2482
        %2547 = vst [vmem:[%s267 + $0x88] sm:$0xff] %v2483
        %2548 = vst [vmem:[%s267 + $0x90] sm:$0xff] %v2484
        %2549 = vst [vmem:[%s267 + $0x98] sm:$0xff] %v2485
        %2550 = vst [vmem:[%s267 + $0xa0] sm:$0xff] %v2486
        %2551 = vst [vmem:[%s267 + $0xa8] sm:$0xff] %v2487
        %2552 = vst [vmem:[%s267 + $0xb0] sm:$0xff] %v2488
        %2553 = vst [vmem:[%s267 + $0xb8] sm:$0xff] %v2489
        %2554 = vst [vmem:[%s267 + $0xc0] sm:$0xff] %v2490
        %2555 = vst [vmem:[%s267 + $0xc8] sm:$0xff] %v2491
        %2556 = vst [vmem:[%s267 + $0xd0] sm:$0xff] %v2492
        %2557 = vst [vmem:[%s267 + $0xd8] sm:$0xff] %v2493
        %2558 = vst [vmem:[%s267 + $0xe0] sm:$0xff] %v2494
        %2559 = vst [vmem:[%s267 + $0xe8] sm:$0xff] %v2495
        %2560 = vst [vmem:[%s267 + $0xf0] sm:$0xff] %v2496
        %2561 = vst [vmem:[%s267 + $0xf8] sm:$0xff] %v2497
        %2562 = vst [vmem:[%s267 + $0x100] sm:$0xff] %v2498
        %2563 = vst [vmem:[%s267 + $0x108] sm:$0xff] %v2499
        %2564 = vst [vmem:[%s267 + $0x110] sm:$0xff] %v2500
        %2565 = vst [vmem:[%s267 + $0x118] sm:$0xff] %v2501
        %2566 = vst [vmem:[%s267 + $0x120] sm:$0xff] %v2502
        %2567 = vst [vmem:[%s267 + $0x128] sm:$0xff] %v2503
        %2568 = vst [vmem:[%s267 + $0x130] sm:$0xff] %v2504
        %2569 = vst [vmem:[%s267 + $0x138] sm:$0xff] %v2505
        %2570 = vst [vmem:[%s267 + $0x140] sm:$0xff] %v2506
        %2571 = vst [vmem:[%s267 + $0x148] sm:$0xff] %v2507
        %2572 = vst [vmem:[%s267 + $0x150] sm:$0xff] %v2508
        %2573 = vst [vmem:[%s267 + $0x158] sm:$0xff] %v2509
        %2574 = vst [vmem:[%s267 + $0x160] sm:$0xff] %v2510
        %2575 = vst [vmem:[%s267 + $0x168] sm:$0xff] %v2511
        %2576 = vst [vmem:[%s267 + $0x170] sm:$0xff] %v2512
        %2577 = vst [vmem:[%s267 + $0x178] sm:$0xff] %v2513
        %2578 = vst [vmem:[%s267 + $0x180] sm:$0xff] %v2514
        %2579 = vst [vmem:[%s267 + $0x188] sm:$0xff] %v2515
        %2580 = vst [vmem:[%s267 + $0x190] sm:$0xff] %v2516
        %2581 = vst [vmem:[%s267 + $0x198] sm:$0xff] %v2517
        %2582 = vst [vmem:[%s267 + $0x1a0] sm:$0xff] %v2518
        %2583 = vst [vmem:[%s267 + $0x1a8] sm:$0xff] %v2519
        %2584 = vst [vmem:[%s267 + $0x1b0] sm:$0xff] %v2520
        %2585 = vst [vmem:[%s267 + $0x1b8] sm:$0xff] %v2521
        %2586 = vst [vmem:[%s267 + $0x1c0] sm:$0xff] %v2522
        %2587 = vst [vmem:[%s267 + $0x1c8] sm:$0xff] %v2523
        %2588 = vst [vmem:[%s267 + $0x1d0] sm:$0xff] %v2524
        %2589 = vst [vmem:[%s267 + $0x1d8] sm:$0xff] %v2525
        %2590 = vst [vmem:[%s267 + $0x1e0] sm:$0xff] %v2526
        %2591 = vst [vmem:[%s267 + $0x1e8] sm:$0xff] %v2527
        %2592 = vst [vmem:[%s267 + $0x1f0] sm:$0xff] %v2528
        %2593 = vst [vmem:[%s267 + $0x1f8] sm:$0xff] %v2529
        %s2594 = sand.u32 %s148, 1
        %s2595 = scalar_lea.sflag [#allocation3], %s2594
        %s2596 = sand.u32 %s148, 1
        %s2597 = smul.addr %s2596, 512
        %s2598 = scalar_lea.vmem [#allocation2], %s2597
        // Predicated region
        $region37: #{tpu_custom_call.1} parent=35 // pred_check
          %p2599 = pneg %p158
        $region38: #{tpu_custom_call.1} parent=35 // pred_check_branch
          %2601 = sbr.rel (%p2599) target = $region40
        $region39: #{tpu_custom_call.1} parent=35 // pred_region
          %s2602 = smul.u32 64, %s23
          %s2604 = ssub.s32 8192, 8192
          %2605 = vsyncadd %s2595, %s2604
          %s2606 = smul.addr %s22, 64
          %s2607 = sadd.s32 %s2602, %s2606
          %s2608 = smul.addr %s2607, 128
          %s2609 = scalar_lea.hbm %s4, %s2608
          %s2610 = sshll.u32 %s2598, 4
          %s2611 = int_to_ptr.vmem [resolvable:$true] %s2610
          %2616 = dma.vmem_to_hbm [thread:$0]  %s2611, 8192, %s2609, %s2595, 128, 128, 8
        $region40: #{tpu_custom_call.1} parent=35 // pred_fallthru
          _
      $region36: #{tpu_custom_call.1} parent=5 // pred_fallthru
        _
      %p2617 = scmp.le.s32.totalorder 2, %s13
      // Predicated region
      $region41: #{tpu_custom_call.1} parent=5 // pred_check
        %p2618 = pneg %p2617
      $region42: #{tpu_custom_call.1} parent=5 // pred_check_branch
        %2620 = sbr.rel (%p2618) target = $region44
      $region43: #{tpu_custom_call.1} parent=5 // pred_region
        %s2621 = ssub.s32 %s13, 2
        // Predicated region
        $region45: #{tpu_custom_call.1} parent=43 // pred_check
          %p2622 = pneg %p164
        $region46: #{tpu_custom_call.1} parent=43 // pred_check_branch
          %2624 = sbr.rel (%p2622) target = $region48
        $region47: #{tpu_custom_call.1} parent=43 // pred_region
          %s2625 = sand.u32 %s149, 1
          %s2626 = scalar_lea.sflag [#allocation3], %s2625
          %s2627 = sand.u32 %s149, 1
          %s2628 = smul.addr %s2627, 512
          %s2629 = scalar_lea.vmem [#allocation2], %s2628
          %2630 = dma.done %s2626, 8192
        $region48: #{tpu_custom_call.1} parent=43 // pred_fallthru
          _
      $region44: #{tpu_custom_call.1} parent=5 // pred_fallthru
        _
    $region6: #{tpu_custom_call.1} parent=1 // loop_footer
      %s17 = sadd.s32 1, %s13
    $region7: #{tpu_custom_call.1} parent=1 // loop_footer_branch
      %12 = sbr.rel target = $region3
    $region8: #{tpu_custom_call.1} parent=1 // loop_exit
      _
    %2631 = vsyncpa [#allocation3], 1
    %s2632 = scalar_lea.sflag [#allocation3], 1
    %2633 = vsyncpa %s2632, 1

</llo_original>
